<compile_context>
chip_gen: v6e
topology: v6e:2x2x1
jax: 0.10.0
libtpu: 0.0.40
codegen_flags: <defaults>
</compile_context>

<pallas_src>
import functools

import jax
import jax.numpy as jnp
from jax.experimental import pallas as pl
from jax.experimental.pallas import tpu as pltpu


def _mcdropout_kernel(*refs, drop_input: bool):
    if drop_input:
        (x_ref, im_ref, h1m_ref, h2m_ref,
         w1_ref, b1_ref, w2_ref, b2_ref, w3_ref, b3_ref, out_ref) = refs
    else:
        (x_ref, h1m_ref, h2m_ref,
         w1_ref, b1_ref, w2_ref, b2_ref, w3_ref, b3_ref, out_ref) = refs

    # Input (bf16). Masks are 0/1 int8 -> select (exact for 0/1 masks).
    x = x_ref[...]
    if drop_input:
        x = jnp.where(im_ref[...] != 0, x, jnp.zeros_like(x))

    # fc1: bf16 MXU matmul, f32 accumulate; bias add + sigmoid in f32.
    h1 = jax.nn.sigmoid(
        jnp.dot(x, w1_ref[...], preferred_element_type=jnp.float32)
        + b1_ref[...])
    # hidden1 dropout (f32 select), cast to bf16 right before the next dot.
    h1 = jnp.where(h1m_ref[...] != 0, h1, 0.0).astype(jnp.bfloat16)

    # fc2
    h2 = jax.nn.sigmoid(
        jnp.dot(h1, w2_ref[...], preferred_element_type=jnp.float32)
        + b2_ref[...])
    h2 = jnp.where(h2m_ref[...] != 0, h2, 0.0).astype(jnp.bfloat16)

    # out layer: N is already padded to a multiple of 128 -> lane-dense store.
    out = (jnp.dot(h2, w3_ref[...], preferred_element_type=jnp.float32)
           + b3_ref[...])
    out_ref[...] = out.astype(out_ref.dtype)


def _choose_block_b(batch, target=256):
    """Largest divisor of `batch` that is <= target.

    target=256 gives MXU/VPU-sized tiles while leaving >=2 grid steps for
    batch >= 512, so the 'parallel' grid axis can shard across v7x's 2 TCs.
    """
    best = 1
    for cand in range(1, min(batch, target) + 1):
        if batch % cand == 0:
            best = cand
    return best


def mcdropout_forward(x, input_mask, hidden1_mask, hidden2_mask, params, *,
                      drop_input=True, block_b=None):
    """Pallas implementation of MCDropoutDynamicsNN.forward.

    x:            (B, input_dim) float32
    *_mask:       (B, dim) 0/1 masks (any dtype; converted to int8 here)
    params: dict with w1 (in, h), b1 (1, h), w2 (h, h), b2 (1, h),
            w3 (h, out), b3 (1, out)   (PyTorch Linear weights, transposed)
    """
    B, in_dim = x.shape
    hidden = params["w1"].shape[1]
    out_dim = params["w3"].shape[1]

    # Lane-dense output: pad the final layer's N up to a multiple of 128.
    out_pad = ((out_dim + 127) // 128) * 128

    # bf16 weights/activations for the MXU; biases stay f32 (added post-accumulate).
    w1 = params["w1"].astype(jnp.bfloat16)
    w2 = params["w2"].astype(jnp.bfloat16)
    w3 = params["w3"].astype(jnp.bfloat16)
    b1 = params["b1"].astype(jnp.float32)
    b2 = params["b2"].astype(jnp.float32)
    b3 = params["b3"].astype(jnp.float32)
    if out_pad != out_dim:
        w3 = jnp.pad(w3, ((0, 0), (0, out_pad - out_dim)))
        b3 = jnp.pad(b3, ((0, 0), (0, out_pad - out_dim)))

    x_c = x.astype(jnp.bfloat16)
    h1m = (hidden1_mask != 0).astype(jnp.int8)
    h2m = (hidden2_mask != 0).astype(jnp.int8)

    if block_b is None:
        block_b = _choose_block_b(B)
    assert B % block_b == 0
    grid = (B // block_b,)

    def batch_spec(feat):
        return pl.BlockSpec((block_b, feat), lambda i: (i, 0))

    def const_spec(r, c):
        # Constant index_map across the batch grid -> Pallas DMAs these once and
        # keeps them resident. (pl.Buffered(1) would also drop the unused second
        # buffer; not needed at these weight sizes.)
        return pl.BlockSpec((r, c), lambda i: (0, 0))

    in_arrays = [x_c]
    in_specs = [batch_spec(in_dim)]
    if drop_input:
        im = (input_mask != 0).astype(jnp.int8)
        in_arrays.append(im)
        in_specs.append(batch_spec(in_dim))
    in_arrays += [h1m, h2m, w1, b1, w2, b2, w3, b3]
    in_specs += [
        batch_spec(hidden),             # hidden1 mask (int8)
        batch_spec(hidden),             # hidden2 mask (int8)
        const_spec(in_dim, hidden),     # w1
        const_spec(1, hidden),          # b1
        const_spec(hidden, hidden),     # w2
        const_spec(1, hidden),          # b2
        const_spec(hidden, out_pad),    # w3 (N padded to 128-multiple)
        const_spec(1, out_pad),         # b3
    ]

    kernel = functools.partial(_mcdropout_kernel, drop_input=drop_input)

    out_padded = pl.pallas_call(
        kernel,
        out_shape=jax.ShapeDtypeStruct((B, out_pad), jnp.float32),
        grid_spec=pltpu.PrefetchScalarGridSpec(
            num_scalar_prefetch=0,
            grid=grid,
            in_specs=in_specs,
            out_specs=batch_spec(out_pad),
        ),
        compiler_params=pltpu.CompilerParams(
            dimension_semantics=("parallel",),
            vmem_limit_bytes=32 * 1024 * 1024,
        ),
    )(*in_arrays)

    if out_pad != out_dim:
        return out_padded[:, :out_dim]
    return out_padded


def init_params(key, input_dim, hidden, output_dim):
    """Deterministic synthetic parameters (PyTorch Linear init, transposed)."""
    ks = jax.random.split(key, 6)

    def lin(kw, kb, fan_in, fan_out):
        bound = 1.0 / jnp.sqrt(fan_in)
        w = jax.random.uniform(kw, (fan_in, fan_out), jnp.float32, -bound, bound)
        b = jax.random.uniform(kb, (1, fan_out), jnp.float32, -bound, bound)
        return w, b

    w1, b1 = lin(ks[0], ks[1], input_dim, hidden)
    w2, b2 = lin(ks[2], ks[3], hidden, hidden)
    w3, b3 = lin(ks[4], ks[5], hidden, output_dim)
    return dict(w1=w1, b1=b1, w2=w2, b2=b2, w3=w3, b3=b3)


def reference_forward(x, im, h1m, h2m, p, drop_input=True):
    """Pure-JAX reference mimicking the kernel's numerics (bf16 operands,
    f32 accumulation, f32 elementwise)."""
    bf = jnp.bfloat16
    x_c = x.astype(bf)
    x_in = jnp.where(im != 0, x_c, jnp.zeros_like(x_c)) if drop_input else x_c
    h1 = jax.nn.sigmoid(
        jnp.dot(x_in, p["w1"].astype(bf), preferred_element_type=jnp.float32)
        + p["b1"])
    h1 = jnp.where(h1m != 0, h1, 0.0).astype(bf)
    h2 = jax.nn.sigmoid(
        jnp.dot(h1, p["w2"].astype(bf), preferred_element_type=jnp.float32)
        + p["b2"])
    h2 = jnp.where(h2m != 0, h2, 0.0).astype(bf)
    return (jnp.dot(h2, p["w3"].astype(bf), preferred_element_type=jnp.float32)
            + p["b3"])


if __name__ == "__main__":
    # MC-dropout particles folded into the batch dimension (64 particles x 8 states),
    # giving a 512-row batch -> two 256-row grid steps.
    n_particles = 64
    n_states = 8
    batch_size = n_particles * n_states          # 512
    input_dim = 16                               # state + action features
    hidden_size = 128                            # lane-aligned hidden width
    output_dim = 8                               # next-state delta
    drop_prob = 0.1

    key = jax.random.PRNGKey(0)
    k_param, k_x, k_m1, k_m2, k_m3 = jax.random.split(key, 5)

    params = init_params(k_param, input_dim, hidden_size, output_dim)
    x = jax.random.normal(k_x, (batch_size, input_dim), jnp.float32)

    # sample_new_mask(): fixed Bernoulli(1 - drop_prob) masks per batch row,
    # reused across forward passes.
    keep = 1.0 - drop_prob
    input_mask = jax.random.bernoulli(
        k_m1, keep, (batch_size, input_dim)).astype(jnp.float32)
    hidden1_mask = jax.random.bernoulli(
        k_m2, keep, (batch_size, hidden_size)).astype(jnp.float32)
    hidden2_mask = jax.random.bernoulli(
        k_m3, keep, (batch_size, hidden_size)).astype(jnp.float32)

    # drop_input=True path
    out = mcdropout_forward(x, input_mask, hidden1_mask, hidden2_mask, params,
                            drop_input=True)
    out = jax.block_until_ready(out)
    ref = reference_forward(x, input_mask, hidden1_mask, hidden2_mask, params,
                            drop_input=True)
    assert out.shape == (batch_size, output_dim)
    assert jnp.allclose(out, ref, atol=2e-2, rtol=2e-2)

    # drop_input=False path (no input mask built or DMA'd)
    out_nd = mcdropout_forward(x, None, hidden1_mask, hidden2_mask, params,
                               drop_input=False)
    out_nd = jax.block_until_ready(out_nd)
    ref_nd = reference_forward(x, None, hidden1_mask, hidden2_mask, params,
                               drop_input=False)
    assert jnp.allclose(out_nd, ref_nd, atol=2e-2, rtol=2e-2)

    print("KERNEL_OK")
</pallas_src>

<mosaic_0001>
module attributes {stable_mosaic.version = 11 : i64} {
  func.func @_mcdropout_kernel(%arg0: i32, %arg1: memref<256x16xbf16, #tpu.memory_space<vmem>>, %arg2: memref<256x16xi8, #tpu.memory_space<vmem>>, %arg3: memref<256x128xi8, #tpu.memory_space<vmem>>, %arg4: memref<256x128xi8, #tpu.memory_space<vmem>>, %arg5: memref<16x128xbf16, #tpu.memory_space<vmem>>, %arg6: memref<1x128xf32, #tpu.memory_space<vmem>>, %arg7: memref<128x128xbf16, #tpu.memory_space<vmem>>, %arg8: memref<1x128xf32, #tpu.memory_space<vmem>>, %arg9: memref<128x128xbf16, #tpu.memory_space<vmem>>, %arg10: memref<1x128xf32, #tpu.memory_space<vmem>>, %arg11: memref<256x128xf32, #tpu.memory_space<vmem>>) attributes {dimension_semantics = [#tpu.dimension_semantics<parallel>], iteration_bounds = array<i64: 2>, scalar_prefetch = 0 : i64, scratch_operands = 0 : i64, tpu.core_type = #tpu.core_type<tc>, window_params = [{transform_indices = @transform_0, window_bounds = array<i64: 256, 16>}, {transform_indices = @transform_1, window_bounds = array<i64: 256, 16>}, {transform_indices = @transform_2, window_bounds = array<i64: 256, 128>}, {transform_indices = @transform_3, window_bounds = array<i64: 256, 128>}, {pipeline_mode = #tpu.pipeline_mode<synchronous>, transform_indices = @transform_4, window_bounds = array<i64: 16, 128>}, {pipeline_mode = #tpu.pipeline_mode<synchronous>, transform_indices = @transform_5, window_bounds = array<i64: 1, 128>}, {pipeline_mode = #tpu.pipeline_mode<synchronous>, transform_indices = @transform_6, window_bounds = array<i64: 128, 128>}, {pipeline_mode = #tpu.pipeline_mode<synchronous>, transform_indices = @transform_7, window_bounds = array<i64: 1, 128>}, {pipeline_mode = #tpu.pipeline_mode<synchronous>, transform_indices = @transform_8, window_bounds = array<i64: 128, 128>}, {pipeline_mode = #tpu.pipeline_mode<synchronous>, transform_indices = @transform_9, window_bounds = array<i64: 1, 128>}, {transform_indices = @transform_10, window_bounds = array<i64: 256, 128>}]} {
    %c0 = arith.constant 0 : index
    %c0_0 = arith.constant 0 : index
    %0 = vector.load %arg1[%c0, %c0_0] : memref<256x16xbf16, #tpu.memory_space<vmem>>, vector<256x16xbf16>
    %c0_1 = arith.constant 0 : index
    %c0_2 = arith.constant 0 : index
    %1 = vector.load %arg2[%c0_1, %c0_2] : memref<256x16xi8, #tpu.memory_space<vmem>>, vector<256x16xi8>
    %c0_i8 = arith.constant 0 : i8
    %2 = vector.broadcast %c0_i8 : i8 to vector<256x16xi8>
    %3 = arith.cmpi ne, %1, %2 : vector<256x16xi8>
    %cst = arith.constant 0.000000e+00 : bf16
    %4 = vector.broadcast %cst : bf16 to vector<256x16xbf16>
    %5 = arith.select %3, %0, %4 : vector<256x16xi1>, vector<256x16xbf16>
    %c0_3 = arith.constant 0 : index
    %c0_4 = arith.constant 0 : index
    %6 = vector.load %arg5[%c0_3, %c0_4] : memref<16x128xbf16, #tpu.memory_space<vmem>>, vector<16x128xbf16>
    %cst_5 = arith.constant dense<0.000000e+00> : vector<256x128xf32>
    %7 = tpu.matmul %5, %6, %cst_5 {dimension_numbers = #tpu.dot_dimension_numbers<[1], [0], [0], [1], [0, 0, 1, 1], [], []>} : vector<256x16xbf16>, vector<16x128xbf16>, vector<256x128xf32> -> vector<256x128xf32>
    %c0_6 = arith.constant 0 : index
    %c0_7 = arith.constant 0 : index
    %8 = vector.load %arg6[%c0_6, %c0_7] : memref<1x128xf32, #tpu.memory_space<vmem>>, vector<1x128xf32>
    %9 = vector.broadcast %8 : vector<1x128xf32> to vector<256x128xf32>
    %10 = arith.addf %7, %9 : vector<256x128xf32>
    %11 = arith.negf %10 : vector<256x128xf32>
    %12 = math.exp %11 : vector<256x128xf32>
    %cst_8 = arith.constant 1.000000e+00 : f32
    %13 = vector.broadcast %cst_8 : f32 to vector<256x128xf32>
    %14 = arith.addf %13, %12 : vector<256x128xf32>
    %15 = arith.divf %13, %14 : vector<256x128xf32>
    %c0_9 = arith.constant 0 : index
    %c0_10 = arith.constant 0 : index
    %16 = vector.load %arg3[%c0_9, %c0_10] : memref<256x128xi8, #tpu.memory_space<vmem>>, vector<256x128xi8>
    %c0_i8_11 = arith.constant 0 : i8
    %17 = vector.broadcast %c0_i8_11 : i8 to vector<256x128xi8>
    %18 = arith.cmpi ne, %16, %17 : vector<256x128xi8>
    %cst_12 = arith.constant 0.000000e+00 : f32
    %19 = vector.broadcast %cst_12 : f32 to vector<256x128xf32>
    %20 = arith.select %18, %15, %19 : vector<256x128xi1>, vector<256x128xf32>
    %21 = arith.truncf %20 : vector<256x128xf32> to vector<256x128xbf16>
    %c0_13 = arith.constant 0 : index
    %c0_14 = arith.constant 0 : index
    %22 = vector.load %arg7[%c0_13, %c0_14] : memref<128x128xbf16, #tpu.memory_space<vmem>>, vector<128x128xbf16>
    %cst_15 = arith.constant dense<0.000000e+00> : vector<256x128xf32>
    %23 = tpu.matmul %21, %22, %cst_15 {dimension_numbers = #tpu.dot_dimension_numbers<[1], [0], [0], [1], [0, 0, 1, 1], [], []>} : vector<256x128xbf16>, vector<128x128xbf16>, vector<256x128xf32> -> vector<256x128xf32>
    %c0_16 = arith.constant 0 : index
    %c0_17 = arith.constant 0 : index
    %24 = vector.load %arg8[%c0_16, %c0_17] : memref<1x128xf32, #tpu.memory_space<vmem>>, vector<1x128xf32>
    %25 = vector.broadcast %24 : vector<1x128xf32> to vector<256x128xf32>
    %26 = arith.addf %23, %25 : vector<256x128xf32>
    %27 = arith.negf %26 : vector<256x128xf32>
    %28 = math.exp %27 : vector<256x128xf32>
    %cst_18 = arith.constant 1.000000e+00 : f32
    %29 = vector.broadcast %cst_18 : f32 to vector<256x128xf32>
    %30 = arith.addf %29, %28 : vector<256x128xf32>
    %31 = arith.divf %29, %30 : vector<256x128xf32>
    %c0_19 = arith.constant 0 : index
    %c0_20 = arith.constant 0 : index
    %32 = vector.load %arg4[%c0_19, %c0_20] : memref<256x128xi8, #tpu.memory_space<vmem>>, vector<256x128xi8>
    %c0_i8_21 = arith.constant 0 : i8
    %33 = vector.broadcast %c0_i8_21 : i8 to vector<256x128xi8>
    %34 = arith.cmpi ne, %32, %33 : vector<256x128xi8>
    %cst_22 = arith.constant 0.000000e+00 : f32
    %35 = vector.broadcast %cst_22 : f32 to vector<256x128xf32>
    %36 = arith.select %34, %31, %35 : vector<256x128xi1>, vector<256x128xf32>
    %37 = arith.truncf %36 : vector<256x128xf32> to vector<256x128xbf16>
    %c0_23 = arith.constant 0 : index
    %c0_24 = arith.constant 0 : index
    %38 = vector.load %arg9[%c0_23, %c0_24] : memref<128x128xbf16, #tpu.memory_space<vmem>>, vector<128x128xbf16>
    %cst_25 = arith.constant dense<0.000000e+00> : vector<256x128xf32>
    %39 = tpu.matmul %37, %38, %cst_25 {dimension_numbers = #tpu.dot_dimension_numbers<[1], [0], [0], [1], [0, 0, 1, 1], [], []>} : vector<256x128xbf16>, vector<128x128xbf16>, vector<256x128xf32> -> vector<256x128xf32>
    %c0_26 = arith.constant 0 : index
    %c0_27 = arith.constant 0 : index
    %40 = vector.load %arg10[%c0_26, %c0_27] : memref<1x128xf32, #tpu.memory_space<vmem>>, vector<1x128xf32>
    %41 = vector.broadcast %40 : vector<1x128xf32> to vector<256x128xf32>
    %42 = arith.addf %39, %41 : vector<256x128xf32>
    %c0_28 = arith.constant 0 : index
    %c0_29 = arith.constant 0 : index
    %43 = vector.load %arg11[%c0_28, %c0_29] : memref<256x128xf32, #tpu.memory_space<vmem>>, vector<256x128xf32>
    tpu.vector_store %arg11[%c0_28, %c0_29], %42 {strides = array<i32>} : memref<256x128xf32, #tpu.memory_space<vmem>>, vector<256x128xf32>,
    return
  }
  func.func @transform_0(%arg0: i32) -> (i32, i32) {
    %c0_i32 = arith.constant 0 : i32
    %c0_i32_0 = arith.constant 0 : i32
    return %arg0, %c0_i32 : i32, i32
  }
  func.func @transform_1(%arg0: i32) -> (i32, i32) {
    %c0_i32 = arith.constant 0 : i32
    %c0_i32_0 = arith.constant 0 : i32
    return %arg0, %c0_i32 : i32, i32
  }
  func.func @transform_2(%arg0: i32) -> (i32, i32) {
    %c0_i32 = arith.constant 0 : i32
    %c0_i32_0 = arith.constant 0 : i32
    return %arg0, %c0_i32 : i32, i32
  }
  func.func @transform_3(%arg0: i32) -> (i32, i32) {
    %c0_i32 = arith.constant 0 : i32
    %c0_i32_0 = arith.constant 0 : i32
    return %arg0, %c0_i32 : i32, i32
  }
  func.func @transform_4(%arg0: i32) -> (i32, i32) {
    %c0_i32 = arith.constant 0 : i32
    %c0_i32_0 = arith.constant 0 : i32
    %c0_i32_1 = arith.constant 0 : i32
    return %c0_i32, %c0_i32_0 : i32, i32
  }
  func.func @transform_5(%arg0: i32) -> (i32, i32) {
    %c0_i32 = arith.constant 0 : i32
    %c0_i32_0 = arith.constant 0 : i32
    %c0_i32_1 = arith.constant 0 : i32
    return %c0_i32, %c0_i32_0 : i32, i32
  }
  func.func @transform_6(%arg0: i32) -> (i32, i32) {
    %c0_i32 = arith.constant 0 : i32
    %c0_i32_0 = arith.constant 0 : i32
    %c0_i32_1 = arith.constant 0 : i32
    return %c0_i32, %c0_i32_0 : i32, i32
  }
  func.func @transform_7(%arg0: i32) -> (i32, i32) {
    %c0_i32 = arith.constant 0 : i32
    %c0_i32_0 = arith.constant 0 : i32
    %c0_i32_1 = arith.constant 0 : i32
    return %c0_i32, %c0_i32_0 : i32, i32
  }
  func.func @transform_8(%arg0: i32) -> (i32, i32) {
    %c0_i32 = arith.constant 0 : i32
    %c0_i32_0 = arith.constant 0 : i32
    %c0_i32_1 = arith.constant 0 : i32
    return %c0_i32, %c0_i32_0 : i32, i32
  }
  func.func @transform_9(%arg0: i32) -> (i32, i32) {
    %c0_i32 = arith.constant 0 : i32
    %c0_i32_0 = arith.constant 0 : i32
    %c0_i32_1 = arith.constant 0 : i32
    return %c0_i32, %c0_i32_0 : i32, i32
  }
  func.func @transform_10(%arg0: i32) -> (i32, i32) {
    %c0_i32 = arith.constant 0 : i32
    %c0_i32_0 = arith.constant 0 : i32
    return %arg0, %c0_i32 : i32, i32
  }
}

</mosaic_0001>

<llo_original>
// kernel: tpu_custom_call.1
$region0: #{tpu_custom_call.1}
  #allocation0 [shape = 'u32[]', space=smem, size = 0x4, offset = 0x4, fixed_abs, tag = 'smem constant byte address 0x4 - core index']
  #allocation1 [shape = 'u32[144,128]{1,0:T(1,128)}', space=vmem, size = 0x12000, scoped, tag = 'internal scratch']
  %s0 = inlined_call_operand.vmem [shape: bf16[512,16], index: 0, kind: input, shape index: {}]
  %s1 = inlined_call_operand.vmem [shape: s8[512,16], index: 1, kind: input, shape index: {}]
  %s2 = inlined_call_operand.vmem [shape: s8[512,128], index: 2, kind: input, shape index: {}]
  %s3 = inlined_call_operand.vmem [shape: s8[512,128], index: 3, kind: input, shape index: {}]
  %s4 = inlined_call_operand.vmem [shape: bf16[16,128], index: 4, kind: input, shape index: {}]
  %s5 = inlined_call_operand.vmem [shape: f32[1,128], index: 5, kind: input, shape index: {}]
  %s6 = inlined_call_operand.vmem [shape: bf16[128,128], index: 6, kind: input, shape index: {}]
  %s7 = inlined_call_operand.vmem [shape: f32[1,128], index: 7, kind: input, shape index: {}]
  %s8 = inlined_call_operand.vmem [shape: bf16[128,128], index: 8, kind: input, shape index: {}]
  %s9 = inlined_call_operand.vmem [shape: f32[1,128], index: 9, kind: input, shape index: {}]
  %s10 = inlined_call_operand.hbm [shape: f32[512,128], index: 10, kind: output, shape index: {}]
  %s11 = sld [smem:[#allocation0]]
  $region73: #{tpu_custom_call.1} parent=0
    _
  %s13 = ssub.s32 1, %s11
  %s14 = scalar_select 0, %s13, %s11
  $region1: #{tpu_custom_call.1} parent=0
    #allocation2 [shape = 'u8[262144]{0}', space=vmem, size = 0x40000, scoped, tag = 'output window, operand 0']
    #allocation3 [shape = 's32[2]{0}', space=sflag, size = 0x8, scoped, tag = 'scoped memory for tpu_custom_call.1']
    %15 = vsyncpa [#allocation3], 0
    %s16 = scalar_lea.sflag [#allocation3], 1
    %17 = vsyncpa %s16, 0
    loop: start=0, step=1, limit=4
    $region2: #{tpu_custom_call.1} parent=1 // loop_pre_header
      _
    $region3: #{tpu_custom_call.1} parent=1 // loop_header
      %s19 = sphi 0, %s23
      %p20 = scmp.ge.s32.totalorder %s19, 4
      %s29 = sphi 0, %s31
      %s32 = sphi 0, %s29
      %s33 = sphi 0, %s32
      %s49 = sphi 0, %s33
      %s55 = sphi 0, %s57
      %s58 = sphi 0, %s55
      %s59 = sphi 0, %s58
      %s75 = sphi 0, %s59
      %s81 = sphi 0, %s83
      %s84 = sphi 0, %s81
      %s85 = sphi 0, %s84
      %s101 = sphi 0, %s85
      %s107 = sphi 0, %s109
      %s110 = sphi 0, %s107
      %s111 = sphi 0, %s110
      %s127 = sphi 0, %s111
      %s131 = sphi 0, %s131
      %s133 = sphi 0, %s131
      %s134 = sphi 0, %s133
      %s148 = sphi 0, %s134
      %s152 = sphi 0, %s152
      %s154 = sphi 0, %s152
      %s155 = sphi 0, %s154
      %s169 = sphi 0, %s155
      %s173 = sphi 0, %s173
      %s175 = sphi 0, %s173
      %s176 = sphi 0, %s175
      %s190 = sphi 0, %s176
      %s194 = sphi 0, %s194
      %s196 = sphi 0, %s194
      %s197 = sphi 0, %s196
      %s211 = sphi 0, %s197
      %s215 = sphi 0, %s215
      %s217 = sphi 0, %s215
      %s218 = sphi 0, %s217
      %s232 = sphi 0, %s218
      %s236 = sphi 0, %s236
      %s238 = sphi 0, %s236
      %s239 = sphi 0, %s238
      %s253 = sphi 0, %s239
      %s259 = sphi 0, %s261
      %s262 = sphi 0, %s259
      %s263 = sphi 0, %s262
      %s279 = sphi 0, %s263
    $region4: #{tpu_custom_call.1} parent=1 // loop_header_branch
      %22 = sbr.rel (%p20) target = $region8
    $region5: #{tpu_custom_call.1} parent=1 // loop_body
      %s24 = ssub.s32 %s19, 1
      %s25 = ssub.s32 %s19, 2
      %s26 = sadd.s32 %s19, 1
      %s27 = ssub.s32 %s19, %s26
      %p28 = scmp.eq.s32.totalorder %s27, 0
      %s30 = sadd.s32 %s29, 1
      %s31 = scalar_select %p28, %s29, %s30
      %p34 = pneg %p28
      %p35 = scmp.eq.s32.totalorder %s19, 1
      %p36 = por %p34, %p35
      %p37 = scmp.ne.s32.totalorder %s29, %s32
      %p38 = scmp.eq.s32.totalorder %s19, 0
      %p39 = por %p37, %p38
      %p40 = scmp.ne.s32.totalorder %s29, %s32
      %p41 = scmp.eq.s32.totalorder %s24, 1
      %p42 = por %p40, %p41
      %p43 = scmp.ne.s32.totalorder %s32, %s33
      %p44 = scmp.eq.s32.totalorder %s24, 0
      %p45 = por %p43, %p44
      %p46 = scmp.ne.s32.totalorder %s32, %s33
      %p47 = scmp.eq.s32.totalorder %s25, 1
      %p48 = por %p46, %p47
      %p50 = scmp.ne.s32.totalorder %s33, %s49
      %p51 = scmp.eq.s32.totalorder %s25, 0
      %p52 = por %p50, %p51
      %s53 = ssub.s32 %s19, %s26
      %p54 = scmp.eq.s32.totalorder %s53, 0
      %s56 = sadd.s32 %s55, 1
      %s57 = scalar_select %p54, %s55, %s56
      %p60 = pneg %p54
      %p61 = scmp.eq.s32.totalorder %s19, 1
      %p62 = por %p60, %p61
      %p63 = scmp.ne.s32.totalorder %s55, %s58
      %p64 = scmp.eq.s32.totalorder %s19, 0
      %p65 = por %p63, %p64
      %p66 = scmp.ne.s32.totalorder %s55, %s58
      %p67 = scmp.eq.s32.totalorder %s24, 1
      %p68 = por %p66, %p67
      %p69 = scmp.ne.s32.totalorder %s58, %s59
      %p70 = scmp.eq.s32.totalorder %s24, 0
      %p71 = por %p69, %p70
      %p72 = scmp.ne.s32.totalorder %s58, %s59
      %p73 = scmp.eq.s32.totalorder %s25, 1
      %p74 = por %p72, %p73
      %p76 = scmp.ne.s32.totalorder %s59, %s75
      %p77 = scmp.eq.s32.totalorder %s25, 0
      %p78 = por %p76, %p77
      %s79 = ssub.s32 %s19, %s26
      %p80 = scmp.eq.s32.totalorder %s79, 0
      %s82 = sadd.s32 %s81, 1
      %s83 = scalar_select %p80, %s81, %s82
      %p86 = pneg %p80
      %p87 = scmp.eq.s32.totalorder %s19, 1
      %p88 = por %p86, %p87
      %p89 = scmp.ne.s32.totalorder %s81, %s84
      %p90 = scmp.eq.s32.totalorder %s19, 0
      %p91 = por %p89, %p90
      %p92 = scmp.ne.s32.totalorder %s81, %s84
      %p93 = scmp.eq.s32.totalorder %s24, 1
      %p94 = por %p92, %p93
      %p95 = scmp.ne.s32.totalorder %s84, %s85
      %p96 = scmp.eq.s32.totalorder %s24, 0
      %p97 = por %p95, %p96
      %p98 = scmp.ne.s32.totalorder %s84, %s85
      %p99 = scmp.eq.s32.totalorder %s25, 1
      %p100 = por %p98, %p99
      %p102 = scmp.ne.s32.totalorder %s85, %s101
      %p103 = scmp.eq.s32.totalorder %s25, 0
      %p104 = por %p102, %p103
      %s105 = ssub.s32 %s19, %s26
      %p106 = scmp.eq.s32.totalorder %s105, 0
      %s108 = sadd.s32 %s107, 1
      %s109 = scalar_select %p106, %s107, %s108
      %p112 = pneg %p106
      %p113 = scmp.eq.s32.totalorder %s19, 1
      %p114 = por %p112, %p113
      %p115 = scmp.ne.s32.totalorder %s107, %s110
      %p116 = scmp.eq.s32.totalorder %s19, 0
      %p117 = por %p115, %p116
      %p118 = scmp.ne.s32.totalorder %s107, %s110
      %p119 = scmp.eq.s32.totalorder %s24, 1
      %p120 = por %p118, %p119
      %p121 = scmp.ne.s32.totalorder %s110, %s111
      %p122 = scmp.eq.s32.totalorder %s24, 0
      %p123 = por %p121, %p122
      %p124 = scmp.ne.s32.totalorder %s110, %s111
      %p125 = scmp.eq.s32.totalorder %s25, 1
      %p126 = por %p124, %p125
      %p128 = scmp.ne.s32.totalorder %s111, %s127
      %p129 = scmp.eq.s32.totalorder %s25, 0
      %p130 = por %p128, %p129
      %s132 = sadd.s32 %s131, 1
      %p135 = scmp.eq.s32.totalorder %s19, 1
      %p136 = scmp.ne.s32.totalorder %s131, %s133
      %p137 = scmp.eq.s32.totalorder %s19, 0
      %p138 = por %p136, %p137
      %p139 = scmp.ne.s32.totalorder %s131, %s133
      %p140 = scmp.eq.s32.totalorder %s24, 1
      %p141 = por %p139, %p140
      %p142 = scmp.ne.s32.totalorder %s133, %s134
      %p143 = scmp.eq.s32.totalorder %s24, 0
      %p144 = por %p142, %p143
      %p145 = scmp.ne.s32.totalorder %s133, %s134
      %p146 = scmp.eq.s32.totalorder %s25, 1
      %p147 = por %p145, %p146
      %p149 = scmp.ne.s32.totalorder %s134, %s148
      %p150 = scmp.eq.s32.totalorder %s25, 0
      %p151 = por %p149, %p150
      %s153 = sadd.s32 %s152, 1
      %p156 = scmp.eq.s32.totalorder %s19, 1
      %p157 = scmp.ne.s32.totalorder %s152, %s154
      %p158 = scmp.eq.s32.totalorder %s19, 0
      %p159 = por %p157, %p158
      %p160 = scmp.ne.s32.totalorder %s152, %s154
      %p161 = scmp.eq.s32.totalorder %s24, 1
      %p162 = por %p160, %p161
      %p163 = scmp.ne.s32.totalorder %s154, %s155
      %p164 = scmp.eq.s32.totalorder %s24, 0
      %p165 = por %p163, %p164
      %p166 = scmp.ne.s32.totalorder %s154, %s155
      %p167 = scmp.eq.s32.totalorder %s25, 1
      %p168 = por %p166, %p167
      %p170 = scmp.ne.s32.totalorder %s155, %s169
      %p171 = scmp.eq.s32.totalorder %s25, 0
      %p172 = por %p170, %p171
      %s174 = sadd.s32 %s173, 1
      %p177 = scmp.eq.s32.totalorder %s19, 1
      %p178 = scmp.ne.s32.totalorder %s173, %s175
      %p179 = scmp.eq.s32.totalorder %s19, 0
      %p180 = por %p178, %p179
      %p181 = scmp.ne.s32.totalorder %s173, %s175
      %p182 = scmp.eq.s32.totalorder %s24, 1
      %p183 = por %p181, %p182
      %p184 = scmp.ne.s32.totalorder %s175, %s176
      %p185 = scmp.eq.s32.totalorder %s24, 0
      %p186 = por %p184, %p185
      %p187 = scmp.ne.s32.totalorder %s175, %s176
      %p188 = scmp.eq.s32.totalorder %s25, 1
      %p189 = por %p187, %p188
      %p191 = scmp.ne.s32.totalorder %s176, %s190
      %p192 = scmp.eq.s32.totalorder %s25, 0
      %p193 = por %p191, %p192
      %s195 = sadd.s32 %s194, 1
      %p198 = scmp.eq.s32.totalorder %s19, 1
      %p199 = scmp.ne.s32.totalorder %s194, %s196
      %p200 = scmp.eq.s32.totalorder %s19, 0
      %p201 = por %p199, %p200
      %p202 = scmp.ne.s32.totalorder %s194, %s196
      %p203 = scmp.eq.s32.totalorder %s24, 1
      %p204 = por %p202, %p203
      %p205 = scmp.ne.s32.totalorder %s196, %s197
      %p206 = scmp.eq.s32.totalorder %s24, 0
      %p207 = por %p205, %p206
      %p208 = scmp.ne.s32.totalorder %s196, %s197
      %p209 = scmp.eq.s32.totalorder %s25, 1
      %p210 = por %p208, %p209
      %p212 = scmp.ne.s32.totalorder %s197, %s211
      %p213 = scmp.eq.s32.totalorder %s25, 0
      %p214 = por %p212, %p213
      %s216 = sadd.s32 %s215, 1
      %p219 = scmp.eq.s32.totalorder %s19, 1
      %p220 = scmp.ne.s32.totalorder %s215, %s217
      %p221 = scmp.eq.s32.totalorder %s19, 0
      %p222 = por %p220, %p221
      %p223 = scmp.ne.s32.totalorder %s215, %s217
      %p224 = scmp.eq.s32.totalorder %s24, 1
      %p225 = por %p223, %p224
      %p226 = scmp.ne.s32.totalorder %s217, %s218
      %p227 = scmp.eq.s32.totalorder %s24, 0
      %p228 = por %p226, %p227
      %p229 = scmp.ne.s32.totalorder %s217, %s218
      %p230 = scmp.eq.s32.totalorder %s25, 1
      %p231 = por %p229, %p230
      %p233 = scmp.ne.s32.totalorder %s218, %s232
      %p234 = scmp.eq.s32.totalorder %s25, 0
      %p235 = por %p233, %p234
      %s237 = sadd.s32 %s236, 1
      %p240 = scmp.eq.s32.totalorder %s19, 1
      %p241 = scmp.ne.s32.totalorder %s236, %s238
      %p242 = scmp.eq.s32.totalorder %s19, 0
      %p243 = por %p241, %p242
      %p244 = scmp.ne.s32.totalorder %s236, %s238
      %p245 = scmp.eq.s32.totalorder %s24, 1
      %p246 = por %p244, %p245
      %p247 = scmp.ne.s32.totalorder %s238, %s239
      %p248 = scmp.eq.s32.totalorder %s24, 0
      %p249 = por %p247, %p248
      %p250 = scmp.ne.s32.totalorder %s238, %s239
      %p251 = scmp.eq.s32.totalorder %s25, 1
      %p252 = por %p250, %p251
      %p254 = scmp.ne.s32.totalorder %s239, %s253
      %p255 = scmp.eq.s32.totalorder %s25, 0
      %p256 = por %p254, %p255
      %s257 = ssub.s32 %s19, %s26
      %p258 = scmp.eq.s32.totalorder %s257, 0
      %s260 = sadd.s32 %s259, 1
      %s261 = scalar_select %p258, %s259, %s260
      %p264 = pneg %p258
      %p265 = scmp.eq.s32.totalorder %s19, 1
      %p266 = por %p264, %p265
      %p267 = scmp.ne.s32.totalorder %s259, %s262
      %p268 = scmp.eq.s32.totalorder %s19, 0
      %p269 = por %p267, %p268
      %p270 = scmp.ne.s32.totalorder %s259, %s262
      %p271 = scmp.eq.s32.totalorder %s24, 1
      %p272 = por %p270, %p271
      %p273 = scmp.ne.s32.totalorder %s262, %s263
      %p274 = scmp.eq.s32.totalorder %s24, 0
      %p275 = por %p273, %p274
      %p276 = scmp.ne.s32.totalorder %s262, %s263
      %p277 = scmp.eq.s32.totalorder %s25, 1
      %p278 = por %p276, %p277
      %p280 = scmp.ne.s32.totalorder %s263, %s279
      %p281 = scmp.eq.s32.totalorder %s25, 0
      %p282 = por %p280, %p281
      %p283 = scmp.le.s32.totalorder 1, %s19
      %p284 = scmp.lt.s32.totalorder %s19, 3
      %p285 = pnand %p283, %p284
      %p286 = pneg %p285
      // Predicated region
      $region9: #{tpu_custom_call.1} parent=5 // pred_check
        _
      $region10: #{tpu_custom_call.1} parent=5 // pred_check_branch
        %288 = sbr.rel (%p285) target = $region12
      $region11: #{tpu_custom_call.1} parent=5 // pred_region
        %s289 = ssub.s32 %s19, 1
        // Predicated region
        $region13: #{tpu_custom_call.1} parent=11 // pred_check
          %p290 = pneg %p144
        $region14: #{tpu_custom_call.1} parent=11 // pred_check_branch
          %292 = sbr.rel (%p290) target = $region16
        $region15: #{tpu_custom_call.1} parent=11 // pred_region
          _
        $region16: #{tpu_custom_call.1} parent=11 // pred_fallthru
          _
        // Predicated region
        $region17: #{tpu_custom_call.1} parent=11 // pred_check
          %p293 = pneg %p165
        $region18: #{tpu_custom_call.1} parent=11 // pred_check_branch
          %295 = sbr.rel (%p293) target = $region20
        $region19: #{tpu_custom_call.1} parent=11 // pred_region
          _
        $region20: #{tpu_custom_call.1} parent=11 // pred_fallthru
          _
        // Predicated region
        $region21: #{tpu_custom_call.1} parent=11 // pred_check
          %p296 = pneg %p186
        $region22: #{tpu_custom_call.1} parent=11 // pred_check_branch
          %298 = sbr.rel (%p296) target = $region24
        $region23: #{tpu_custom_call.1} parent=11 // pred_region
          _
        $region24: #{tpu_custom_call.1} parent=11 // pred_fallthru
          _
        // Predicated region
        $region25: #{tpu_custom_call.1} parent=11 // pred_check
          %p299 = pneg %p207
        $region26: #{tpu_custom_call.1} parent=11 // pred_check_branch
          %301 = sbr.rel (%p299) target = $region28
        $region27: #{tpu_custom_call.1} parent=11 // pred_region
          _
        $region28: #{tpu_custom_call.1} parent=11 // pred_fallthru
          _
        // Predicated region
        $region29: #{tpu_custom_call.1} parent=11 // pred_check
          %p302 = pneg %p228
        $region30: #{tpu_custom_call.1} parent=11 // pred_check_branch
          %304 = sbr.rel (%p302) target = $region32
        $region31: #{tpu_custom_call.1} parent=11 // pred_region
          _
        $region32: #{tpu_custom_call.1} parent=11 // pred_fallthru
          _
        // Predicated region
        $region33: #{tpu_custom_call.1} parent=11 // pred_check
          %p305 = pneg %p249
        $region34: #{tpu_custom_call.1} parent=11 // pred_check_branch
          %307 = sbr.rel (%p305) target = $region36
        $region35: #{tpu_custom_call.1} parent=11 // pred_region
          _
        $region36: #{tpu_custom_call.1} parent=11 // pred_fallthru
          _
      $region12: #{tpu_custom_call.1} parent=5 // pred_fallthru
        _
      %p308 = scmp.lt.s32.totalorder %s19, 2
      // Predicated region
      $region37: #{tpu_custom_call.1} parent=5 // pred_check
        %p309 = pneg %p308
      $region38: #{tpu_custom_call.1} parent=5 // pred_check_branch
        %311 = sbr.rel (%p309) target = $region40
      $region39: #{tpu_custom_call.1} parent=5 // pred_region
        // Predicated region
        $region41: #{tpu_custom_call.1} parent=39 // pred_check
          %p312 = pneg %p39
        $region42: #{tpu_custom_call.1} parent=39 // pred_check_branch
          %314 = sbr.rel (%p312) target = $region44
        $region43: #{tpu_custom_call.1} parent=39 // pred_region
          %s315 = smul.u32 32, %s19
          %p316 = scmp.lt.s32.totalorder %s315, 63
          %s317 = scalar_select %p316, %s315, 63
          %s318 = smul.addr %s317, 4
          %s319 = scalar_lea.vmem %s0, %s318
          %s320 = smul.u32 32, %s19
        $region44: #{tpu_custom_call.1} parent=39 // pred_fallthru
          _
        // Predicated region
        $region45: #{tpu_custom_call.1} parent=39 // pred_check
          %p321 = pneg %p65
        $region46: #{tpu_custom_call.1} parent=39 // pred_check_branch
          %323 = sbr.rel (%p321) target = $region48
        $region47: #{tpu_custom_call.1} parent=39 // pred_region
          %s324 = smul.u32 8, %s19
          %p325 = scmp.lt.s32.totalorder %s324, 15
          %s326 = scalar_select %p325, %s324, 15
          %s327 = smul.addr %s326, 8
          %s328 = scalar_lea.vmem %s1, %s327
          %s329 = smul.u32 8, %s19
        $region48: #{tpu_custom_call.1} parent=39 // pred_fallthru
          _
        // Predicated region
        $region49: #{tpu_custom_call.1} parent=39 // pred_check
          %p330 = pneg %p91
        $region50: #{tpu_custom_call.1} parent=39 // pred_check_branch
          %332 = sbr.rel (%p330) target = $region52
        $region51: #{tpu_custom_call.1} parent=39 // pred_region
          %s333 = smul.u32 8, %s19
          %p334 = scmp.lt.s32.totalorder %s333, 15
          %s335 = scalar_select %p334, %s333, 15
          %s336 = smul.addr %s335, 8
          %s337 = scalar_lea.vmem %s2, %s336
          %s338 = smul.u32 8, %s19
        $region52: #{tpu_custom_call.1} parent=39 // pred_fallthru
          _
        // Predicated region
        $region53: #{tpu_custom_call.1} parent=39 // pred_check
          %p339 = pneg %p117
        $region54: #{tpu_custom_call.1} parent=39 // pred_check_branch
          %341 = sbr.rel (%p339) target = $region56
        $region55: #{tpu_custom_call.1} parent=39 // pred_region
          %s342 = smul.u32 8, %s19
          %p343 = scmp.lt.s32.totalorder %s342, 15
          %s344 = scalar_select %p343, %s342, 15
          %s345 = smul.addr %s344, 8
          %s346 = scalar_lea.vmem %s3, %s345
          %s347 = smul.u32 8, %s19
        $region56: #{tpu_custom_call.1} parent=39 // pred_fallthru
          _
      $region40: #{tpu_custom_call.1} parent=5 // pred_fallthru
        _
      %p348 = scmp.le.s32.totalorder 1, %s19
      %p349 = scmp.lt.s32.totalorder %s19, 3
      %p350 = pnand %p348, %p349
      %p351 = pneg %p350
      // Predicated region
      $region57: #{tpu_custom_call.1} parent=5 // pred_check
        _
      $region58: #{tpu_custom_call.1} parent=5 // pred_check_branch
        %353 = sbr.rel (%p350) target = $region60
      $region59: #{tpu_custom_call.1} parent=5 // pred_region
        %s354 = ssub.s32 %s19, 1
        %s355 = smul.u32 32, %s24
        %p356 = scmp.lt.s32.totalorder %s355, 63
        %s357 = scalar_select %p356, %s355, 63
        %s358 = smul.addr %s357, 4
        %s359 = scalar_lea.vmem %s0, %s358
        %p360 = pneg %p45
        %p361 = pneg %p42
        %s362 = smul.u32 8, %s24
        %p363 = scmp.lt.s32.totalorder %s362, 15
        %s364 = scalar_select %p363, %s362, 15
        %s365 = smul.addr %s364, 8
        %s366 = scalar_lea.vmem %s1, %s365
        %p367 = pneg %p71
        %p368 = pneg %p68
        %s369 = smul.u32 8, %s24
        %p370 = scmp.lt.s32.totalorder %s369, 15
        %s371 = scalar_select %p370, %s369, 15
        %s372 = smul.addr %s371, 8
        %s373 = scalar_lea.vmem %s2, %s372
        %p374 = pneg %p97
        %p375 = pneg %p94
        %s376 = smul.u32 8, %s24
        %p377 = scmp.lt.s32.totalorder %s376, 15
        %s378 = scalar_select %p377, %s376, 15
        %s379 = smul.addr %s378, 8
        %s380 = scalar_lea.vmem %s3, %s379
        %p381 = pneg %p123
        %p382 = pneg %p120
        %p383 = pneg %p144
        %p384 = pneg %p141
        %p385 = pneg %p165
        %p386 = pneg %p162
        %p387 = pneg %p186
        %p388 = pneg %p183
        %p389 = pneg %p207
        %p390 = pneg %p204
        %p391 = pneg %p228
        %p392 = pneg %p225
        %p393 = pneg %p249
        %p394 = pneg %p246
        %p395 = pneg %p275
        %p396 = pneg %p272
        %s397 = sand.u32 %s262, 1
        %s398 = scalar_lea.sflag [#allocation3], %s397
        %s399 = sand.u32 %s262, 1
        %s400 = smul.addr %s399, 256
        %s401 = scalar_lea.vmem [#allocation2], %s400
        %s402 = smul.u32 32, %s24
        %p403 = scmp.lt.s32.totalorder %s402, 63
        %s404 = scalar_select %p403, %s402, 63
        %s405 = smul.addr %s404, 4
        %s406 = scalar_lea.vmem %s0, %s405
        %s407 = smul.u32 32, %s24
        %s408 = smul.u32 8, %s24
        %p409 = scmp.lt.s32.totalorder %s408, 15
        %s410 = scalar_select %p409, %s408, 15
        %s411 = smul.addr %s410, 8
        %s412 = scalar_lea.vmem %s1, %s411
        %s413 = smul.u32 8, %s24
        %s414 = smul.u32 8, %s24
        %p415 = scmp.lt.s32.totalorder %s414, 15
        %s416 = scalar_select %p415, %s414, 15
        %s417 = smul.addr %s416, 8
        %s418 = scalar_lea.vmem %s2, %s417
        %s419 = smul.u32 8, %s24
        %s420 = smul.u32 8, %s24
        %p421 = scmp.lt.s32.totalorder %s420, 15
        %s422 = scalar_select %p421, %s420, 15
        %s423 = smul.addr %s422, 8
        %s424 = scalar_lea.vmem %s3, %s423
        %s425 = smul.u32 8, %s24
        %s426 = smul.u32 32, %s24
        %v431 = vld [vmem:[%s406] sm:$0xf]
        %v432 = vld [vmem:[%s406 + $0x4] sm:$0xf]
        %v433 = vld [vmem:[%s406 + $0x8] sm:$0xf]
        %v434 = vld [vmem:[%s406 + $0xc] sm:$0xf]
        %v435 = vld [vmem:[%s406 + $0x10] sm:$0xf]
        %v436 = vld [vmem:[%s406 + $0x14] sm:$0xf]
        %v437 = vld [vmem:[%s406 + $0x18] sm:$0xf]
        %v438 = vld [vmem:[%s406 + $0x1c] sm:$0xf]
        %v439 = vld [vmem:[%s406 + $0x20] sm:$0xf]
        %v440 = vld [vmem:[%s406 + $0x24] sm:$0xf]
        %v441 = vld [vmem:[%s406 + $0x28] sm:$0xf]
        %v442 = vld [vmem:[%s406 + $0x2c] sm:$0xf]
        %v443 = vld [vmem:[%s406 + $0x30] sm:$0xf]
        %v444 = vld [vmem:[%s406 + $0x34] sm:$0xf]
        %v445 = vld [vmem:[%s406 + $0x38] sm:$0xf]
        %v446 = vld [vmem:[%s406 + $0x3c] sm:$0xf]
        %v447 = vld [vmem:[%s406 + $0x40] sm:$0xf]
        %v448 = vld [vmem:[%s406 + $0x44] sm:$0xf]
        %v449 = vld [vmem:[%s406 + $0x48] sm:$0xf]
        %v450 = vld [vmem:[%s406 + $0x4c] sm:$0xf]
        %v451 = vld [vmem:[%s406 + $0x50] sm:$0xf]
        %v452 = vld [vmem:[%s406 + $0x54] sm:$0xf]
        %v453 = vld [vmem:[%s406 + $0x58] sm:$0xf]
        %v454 = vld [vmem:[%s406 + $0x5c] sm:$0xf]
        %v455 = vld [vmem:[%s406 + $0x60] sm:$0xf]
        %v456 = vld [vmem:[%s406 + $0x64] sm:$0xf]
        %v457 = vld [vmem:[%s406 + $0x68] sm:$0xf]
        %v458 = vld [vmem:[%s406 + $0x6c] sm:$0xf]
        %v459 = vld [vmem:[%s406 + $0x70] sm:$0xf]
        %v460 = vld [vmem:[%s406 + $0x74] sm:$0xf]
        %v461 = vld [vmem:[%s406 + $0x78] sm:$0xf]
        %v462 = vld [vmem:[%s406 + $0x7c] sm:$0xf]
        %v463 = vld [vmem:[%s412] sm:$0xff]
        %v464 = vld [vmem:[%s412 + $0x8] sm:$0xff]
        %v465 = vld [vmem:[%s412 + $0x10] sm:$0xff]
        %v466 = vld [vmem:[%s412 + $0x18] sm:$0xff]
        %v467 = vld [vmem:[%s412 + $0x20] sm:$0xff]
        %v468 = vld [vmem:[%s412 + $0x28] sm:$0xff]
        %v469 = vld [vmem:[%s412 + $0x30] sm:$0xff]
        %v470 = vld [vmem:[%s412 + $0x38] sm:$0xff]
        %vm471 = vnez %v463
        %vm472 = vnez %v464
        %vm473 = vnez %v465
        %vm474 = vnez %v466
        %vm475 = vnez %v467
        %vm476 = vnez %v468
        %vm477 = vnez %v469
        %vm478 = vnez %v470
        %v479 = vsel %vm471, 16843009, 0
        %v480 = vsel %vm472, 16843009, 0
        %v481 = vsel %vm473, 16843009, 0
        %v482 = vsel %vm474, 16843009, 0
        %v483 = vsel %vm475, 16843009, 0
        %v484 = vsel %vm476, 16843009, 0
        %v485 = vsel %vm477, 16843009, 0
        %v486 = vsel %vm478, 16843009, 0
        %v487 = vunpack.c.0.s8 %v479
        %v488 = vunpack.c.1.s8 %v479
        %v489 = vunpack.c.2.s8 %v479
        %v490 = vunpack.c.3.s8 %v479
        %v491 = vunpack.c.0.s8 %v480
        %v492 = vunpack.c.1.s8 %v480
        %v493 = vunpack.c.2.s8 %v480
        %v494 = vunpack.c.3.s8 %v480
        %v495 = vunpack.c.0.s8 %v481
        %v496 = vunpack.c.1.s8 %v481
        %v497 = vunpack.c.2.s8 %v481
        %v498 = vunpack.c.3.s8 %v481
        %v499 = vunpack.c.0.s8 %v482
        %v500 = vunpack.c.1.s8 %v482
        %v501 = vunpack.c.2.s8 %v482
        %v502 = vunpack.c.3.s8 %v482
        %v503 = vunpack.c.0.s8 %v483
        %v504 = vunpack.c.1.s8 %v483
        %v505 = vunpack.c.2.s8 %v483
        %v506 = vunpack.c.3.s8 %v483
        %v507 = vunpack.c.0.s8 %v484
        %v508 = vunpack.c.1.s8 %v484
        %v509 = vunpack.c.2.s8 %v484
        %v510 = vunpack.c.3.s8 %v484
        %v511 = vunpack.c.0.s8 %v485
        %v512 = vunpack.c.1.s8 %v485
        %v513 = vunpack.c.2.s8 %v485
        %v514 = vunpack.c.3.s8 %v485
        %v515 = vunpack.c.0.s8 %v486
        %v516 = vunpack.c.1.s8 %v486
        %v517 = vunpack.c.2.s8 %v486
        %v518 = vunpack.c.3.s8 %v486
        %v519 = vpack.c.b16 %v487, %v487
        %v520 = vpack.c.b8 %v519, %v519
        %v521 = vpack.c.b16 %v488, %v488
        %v522 = vpack.c.b8 %v521, %v521
        %v523 = vpack.c.b16 %v489, %v489
        %v524 = vpack.c.b8 %v523, %v523
        %v525 = vpack.c.b16 %v490, %v490
        %v526 = vpack.c.b8 %v525, %v525
        %v527 = vpack.c.b16 %v491, %v491
        %v528 = vpack.c.b8 %v527, %v527
        %v529 = vpack.c.b16 %v492, %v492
        %v530 = vpack.c.b8 %v529, %v529
        %v531 = vpack.c.b16 %v493, %v493
        %v532 = vpack.c.b8 %v531, %v531
        %v533 = vpack.c.b16 %v494, %v494
        %v534 = vpack.c.b8 %v533, %v533
        %v535 = vpack.c.b16 %v495, %v495
        %v536 = vpack.c.b8 %v535, %v535
        %v537 = vpack.c.b16 %v496, %v496
        %v538 = vpack.c.b8 %v537, %v537
        %v539 = vpack.c.b16 %v497, %v497
        %v540 = vpack.c.b8 %v539, %v539
        %v541 = vpack.c.b16 %v498, %v498
        %v542 = vpack.c.b8 %v541, %v541
        %v543 = vpack.c.b16 %v499, %v499
        %v544 = vpack.c.b8 %v543, %v543
        %v545 = vpack.c.b16 %v500, %v500
        %v546 = vpack.c.b8 %v545, %v545
        %v547 = vpack.c.b16 %v501, %v501
        %v548 = vpack.c.b8 %v547, %v547
        %v549 = vpack.c.b16 %v502, %v502
        %v550 = vpack.c.b8 %v549, %v549
        %v551 = vpack.c.b16 %v503, %v503
        %v552 = vpack.c.b8 %v551, %v551
        %v553 = vpack.c.b16 %v504, %v504
        %v554 = vpack.c.b8 %v553, %v553
        %v555 = vpack.c.b16 %v505, %v505
        %v556 = vpack.c.b8 %v555, %v555
        %v557 = vpack.c.b16 %v506, %v506
        %v558 = vpack.c.b8 %v557, %v557
        %v559 = vpack.c.b16 %v507, %v507
        %v560 = vpack.c.b8 %v559, %v559
        %v561 = vpack.c.b16 %v508, %v508
        %v562 = vpack.c.b8 %v561, %v561
        %v563 = vpack.c.b16 %v509, %v509
        %v564 = vpack.c.b8 %v563, %v563
        %v565 = vpack.c.b16 %v510, %v510
        %v566 = vpack.c.b8 %v565, %v565
        %v567 = vpack.c.b16 %v511, %v511
        %v568 = vpack.c.b8 %v567, %v567
        %v569 = vpack.c.b16 %v512, %v512
        %v570 = vpack.c.b8 %v569, %v569
        %v571 = vpack.c.b16 %v513, %v513
        %v572 = vpack.c.b8 %v571, %v571
        %v573 = vpack.c.b16 %v514, %v514
        %v574 = vpack.c.b8 %v573, %v573
        %v575 = vpack.c.b16 %v515, %v515
        %v576 = vpack.c.b8 %v575, %v575
        %v577 = vpack.c.b16 %v516, %v516
        %v578 = vpack.c.b8 %v577, %v577
        %v579 = vpack.c.b16 %v517, %v517
        %v580 = vpack.c.b8 %v579, %v579
        %v581 = vpack.c.b16 %v518, %v518
        %v582 = vpack.c.b8 %v581, %v581
        %vm583 = vnez %v520
        %vm584 = vnez %v522
        %vm585 = vnez %v524
        %vm586 = vnez %v526
        %vm587 = vnez %v528
        %vm588 = vnez %v530
        %vm589 = vnez %v532
        %vm590 = vnez %v534
        %vm591 = vnez %v536
        %vm592 = vnez %v538
        %vm593 = vnez %v540
        %vm594 = vnez %v542
        %vm595 = vnez %v544
        %vm596 = vnez %v546
        %vm597 = vnez %v548
        %vm598 = vnez %v550
        %vm599 = vnez %v552
        %vm600 = vnez %v554
        %vm601 = vnez %v556
        %vm602 = vnez %v558
        %vm603 = vnez %v560
        %vm604 = vnez %v562
        %vm605 = vnez %v564
        %vm606 = vnez %v566
        %vm607 = vnez %v568
        %vm608 = vnez %v570
        %vm609 = vnez %v572
        %vm610 = vnez %v574
        %vm611 = vnez %v576
        %vm612 = vnez %v578
        %vm613 = vnez %v580
        %vm614 = vnez %v582
        %v615 = vsel %vm583, 16843009, 0
        %v616 = vsel %vm584, 16843009, 0
        %v617 = vsel %vm585, 16843009, 0
        %v618 = vsel %vm586, 16843009, 0
        %v619 = vsel %vm587, 16843009, 0
        %v620 = vsel %vm588, 16843009, 0
        %v621 = vsel %vm589, 16843009, 0
        %v622 = vsel %vm590, 16843009, 0
        %v623 = vsel %vm591, 16843009, 0
        %v624 = vsel %vm592, 16843009, 0
        %v625 = vsel %vm593, 16843009, 0
        %v626 = vsel %vm594, 16843009, 0
        %v627 = vsel %vm595, 16843009, 0
        %v628 = vsel %vm596, 16843009, 0
        %v629 = vsel %vm597, 16843009, 0
        %v630 = vsel %vm598, 16843009, 0
        %v631 = vsel %vm599, 16843009, 0
        %v632 = vsel %vm600, 16843009, 0
        %v633 = vsel %vm601, 16843009, 0
        %v634 = vsel %vm602, 16843009, 0
        %v635 = vsel %vm603, 16843009, 0
        %v636 = vsel %vm604, 16843009, 0
        %v637 = vsel %vm605, 16843009, 0
        %v638 = vsel %vm606, 16843009, 0
        %v639 = vsel %vm607, 16843009, 0
        %v640 = vsel %vm608, 16843009, 0
        %v641 = vsel %vm609, 16843009, 0
        %v642 = vsel %vm610, 16843009, 0
        %v643 = vsel %vm611, 16843009, 0
        %v644 = vsel %vm612, 16843009, 0
        %v645 = vsel %vm613, 16843009, 0
        %v646 = vsel %vm614, 16843009, 0
        %v647 = vunpack.c.1.s8 %v615
        %v648 = vunpack.c.0.s8 %v615
        %v649 = vpack.c.b16 %v647, %v648
        %v650 = vunpack.c.1.s8 %v616
        %v651 = vunpack.c.0.s8 %v616
        %v652 = vpack.c.b16 %v650, %v651
        %v653 = vunpack.c.1.s8 %v617
        %v654 = vunpack.c.0.s8 %v617
        %v655 = vpack.c.b16 %v653, %v654
        %v656 = vunpack.c.1.s8 %v618
        %v657 = vunpack.c.0.s8 %v618
        %v658 = vpack.c.b16 %v656, %v657
        %v659 = vunpack.c.1.s8 %v619
        %v660 = vunpack.c.0.s8 %v619
        %v661 = vpack.c.b16 %v659, %v660
        %v662 = vunpack.c.1.s8 %v620
        %v663 = vunpack.c.0.s8 %v620
        %v664 = vpack.c.b16 %v662, %v663
        %v665 = vunpack.c.1.s8 %v621
        %v666 = vunpack.c.0.s8 %v621
        %v667 = vpack.c.b16 %v665, %v666
        %v668 = vunpack.c.1.s8 %v622
        %v669 = vunpack.c.0.s8 %v622
        %v670 = vpack.c.b16 %v668, %v669
        %v671 = vunpack.c.1.s8 %v623
        %v672 = vunpack.c.0.s8 %v623
        %v673 = vpack.c.b16 %v671, %v672
        %v674 = vunpack.c.1.s8 %v624
        %v675 = vunpack.c.0.s8 %v624
        %v676 = vpack.c.b16 %v674, %v675
        %v677 = vunpack.c.1.s8 %v625
        %v678 = vunpack.c.0.s8 %v625
        %v679 = vpack.c.b16 %v677, %v678
        %v680 = vunpack.c.1.s8 %v626
        %v681 = vunpack.c.0.s8 %v626
        %v682 = vpack.c.b16 %v680, %v681
        %v683 = vunpack.c.1.s8 %v627
        %v684 = vunpack.c.0.s8 %v627
        %v685 = vpack.c.b16 %v683, %v684
        %v686 = vunpack.c.1.s8 %v628
        %v687 = vunpack.c.0.s8 %v628
        %v688 = vpack.c.b16 %v686, %v687
        %v689 = vunpack.c.1.s8 %v629
        %v690 = vunpack.c.0.s8 %v629
        %v691 = vpack.c.b16 %v689, %v690
        %v692 = vunpack.c.1.s8 %v630
        %v693 = vunpack.c.0.s8 %v630
        %v694 = vpack.c.b16 %v692, %v693
        %v695 = vunpack.c.1.s8 %v631
        %v696 = vunpack.c.0.s8 %v631
        %v697 = vpack.c.b16 %v695, %v696
        %v698 = vunpack.c.1.s8 %v632
        %v699 = vunpack.c.0.s8 %v632
        %v700 = vpack.c.b16 %v698, %v699
        %v701 = vunpack.c.1.s8 %v633
        %v702 = vunpack.c.0.s8 %v633
        %v703 = vpack.c.b16 %v701, %v702
        %v704 = vunpack.c.1.s8 %v634
        %v705 = vunpack.c.0.s8 %v634
        %v706 = vpack.c.b16 %v704, %v705
        %v707 = vunpack.c.1.s8 %v635
        %v708 = vunpack.c.0.s8 %v635
        %v709 = vpack.c.b16 %v707, %v708
        %v710 = vunpack.c.1.s8 %v636
        %v711 = vunpack.c.0.s8 %v636
        %v712 = vpack.c.b16 %v710, %v711
        %v713 = vunpack.c.1.s8 %v637
        %v714 = vunpack.c.0.s8 %v637
        %v715 = vpack.c.b16 %v713, %v714
        %v716 = vunpack.c.1.s8 %v638
        %v717 = vunpack.c.0.s8 %v638
        %v718 = vpack.c.b16 %v716, %v717
        %v719 = vunpack.c.1.s8 %v639
        %v720 = vunpack.c.0.s8 %v639
        %v721 = vpack.c.b16 %v719, %v720
        %v722 = vunpack.c.1.s8 %v640
        %v723 = vunpack.c.0.s8 %v640
        %v724 = vpack.c.b16 %v722, %v723
        %v725 = vunpack.c.1.s8 %v641
        %v726 = vunpack.c.0.s8 %v641
        %v727 = vpack.c.b16 %v725, %v726
        %v728 = vunpack.c.1.s8 %v642
        %v729 = vunpack.c.0.s8 %v642
        %v730 = vpack.c.b16 %v728, %v729
        %v731 = vunpack.c.1.s8 %v643
        %v732 = vunpack.c.0.s8 %v643
        %v733 = vpack.c.b16 %v731, %v732
        %v734 = vunpack.c.1.s8 %v644
        %v735 = vunpack.c.0.s8 %v644
        %v736 = vpack.c.b16 %v734, %v735
        %v737 = vunpack.c.1.s8 %v645
        %v738 = vunpack.c.0.s8 %v645
        %v739 = vpack.c.b16 %v737, %v738
        %v740 = vunpack.c.1.s8 %v646
        %v741 = vunpack.c.0.s8 %v646
        %v742 = vpack.c.b16 %v740, %v741
        %vm743 = vcmp.ne.s16.totalorder %v649, 0
        %vm744 = vcmp.ne.s16.totalorder %v652, 0
        %vm745 = vcmp.ne.s16.totalorder %v655, 0
        %vm746 = vcmp.ne.s16.totalorder %v658, 0
        %vm747 = vcmp.ne.s16.totalorder %v661, 0
        %vm748 = vcmp.ne.s16.totalorder %v664, 0
        %vm749 = vcmp.ne.s16.totalorder %v667, 0
        %vm750 = vcmp.ne.s16.totalorder %v670, 0
        %vm751 = vcmp.ne.s16.totalorder %v673, 0
        %vm752 = vcmp.ne.s16.totalorder %v676, 0
        %vm753 = vcmp.ne.s16.totalorder %v679, 0
        %vm754 = vcmp.ne.s16.totalorder %v682, 0
        %vm755 = vcmp.ne.s16.totalorder %v685, 0
        %vm756 = vcmp.ne.s16.totalorder %v688, 0
        %vm757 = vcmp.ne.s16.totalorder %v691, 0
        %vm758 = vcmp.ne.s16.totalorder %v694, 0
        %vm759 = vcmp.ne.s16.totalorder %v697, 0
        %vm760 = vcmp.ne.s16.totalorder %v700, 0
        %vm761 = vcmp.ne.s16.totalorder %v703, 0
        %vm762 = vcmp.ne.s16.totalorder %v706, 0
        %vm763 = vcmp.ne.s16.totalorder %v709, 0
        %vm764 = vcmp.ne.s16.totalorder %v712, 0
        %vm765 = vcmp.ne.s16.totalorder %v715, 0
        %vm766 = vcmp.ne.s16.totalorder %v718, 0
        %vm767 = vcmp.ne.s16.totalorder %v721, 0
        %vm768 = vcmp.ne.s16.totalorder %v724, 0
        %vm769 = vcmp.ne.s16.totalorder %v727, 0
        %vm770 = vcmp.ne.s16.totalorder %v730, 0
        %vm771 = vcmp.ne.s16.totalorder %v733, 0
        %vm772 = vcmp.ne.s16.totalorder %v736, 0
        %vm773 = vcmp.ne.s16.totalorder %v739, 0
        %vm774 = vcmp.ne.s16.totalorder %v742, 0
        %v775 = vsel %vm743, %v431, 0
        %v776 = vsel %vm744, %v432, 0
        %v777 = vsel %vm745, %v433, 0
        %v778 = vsel %vm746, %v434, 0
        %v779 = vsel %vm747, %v435, 0
        %v780 = vsel %vm748, %v436, 0
        %v781 = vsel %vm749, %v437, 0
        %v782 = vsel %vm750, %v438, 0
        %v783 = vsel %vm751, %v439, 0
        %v784 = vsel %vm752, %v440, 0
        %v785 = vsel %vm753, %v441, 0
        %v786 = vsel %vm754, %v442, 0
        %v787 = vsel %vm755, %v443, 0
        %v788 = vsel %vm756, %v444, 0
        %v789 = vsel %vm757, %v445, 0
        %v790 = vsel %vm758, %v446, 0
        %v791 = vsel %vm759, %v447, 0
        %v792 = vsel %vm760, %v448, 0
        %v793 = vsel %vm761, %v449, 0
        %v794 = vsel %vm762, %v450, 0
        %v795 = vsel %vm763, %v451, 0
        %v796 = vsel %vm764, %v452, 0
        %v797 = vsel %vm765, %v453, 0
        %v798 = vsel %vm766, %v454, 0
        %v799 = vsel %vm767, %v455, 0
        %v800 = vsel %vm768, %v456, 0
        %v801 = vsel %vm769, %v457, 0
        %v802 = vsel %vm770, %v458, 0
        %v803 = vsel %vm771, %v459, 0
        %v804 = vsel %vm772, %v460, 0
        %v805 = vsel %vm773, %v461, 0
        %v806 = vsel %vm774, %v462, 0
        %v807 = vld [vmem:[%s4] sm:$0xf]
        %v808 = vld [vmem:[%s4 + $0x4] sm:$0xf]
        %v809 = vld [vmem:[%s5] sm:$0x1]
        %v811 = vlaneseq
        %v812 = vshrl.u32 %v811, 7
        %v813 = vsub.s32 0, %v812
        %v814 = vrot.slane %v809, %v813
        %v848 = vunpack.c.l.b16 %v775
        %v849 = vunpack.c.l.b16 %v776
        %v850 = vunpack.c.l.b16 %v777
        %v851 = vunpack.c.l.b16 %v778
        %v852 = vunpack.c.l.b16 %v779
        %v853 = vunpack.c.l.b16 %v780
        %v854 = vunpack.c.l.b16 %v781
        %v855 = vunpack.c.l.b16 %v782
        %v856 = vunpack.c.l.b16 %v783
        %v857 = vunpack.c.l.b16 %v784
        %v858 = vunpack.c.l.b16 %v785
        %v859 = vunpack.c.l.b16 %v786
        %v860 = vunpack.c.l.b16 %v787
        %v861 = vunpack.c.l.b16 %v788
        %v862 = vunpack.c.l.b16 %v789
        %v863 = vunpack.c.l.b16 %v790
        %v864 = vunpack.c.l.b16 %v791
        %v865 = vunpack.c.l.b16 %v792
        %v866 = vunpack.c.l.b16 %v793
        %v867 = vunpack.c.l.b16 %v794
        %v868 = vunpack.c.l.b16 %v795
        %v869 = vunpack.c.l.b16 %v796
        %v870 = vunpack.c.l.b16 %v797
        %v871 = vunpack.c.l.b16 %v798
        %v872 = vunpack.c.l.b16 %v799
        %v873 = vunpack.c.l.b16 %v800
        %v874 = vunpack.c.l.b16 %v801
        %v875 = vunpack.c.l.b16 %v802
        %v876 = vunpack.c.l.b16 %v803
        %v877 = vunpack.c.l.b16 %v804
        %v878 = vunpack.c.l.b16 %v805
        %v879 = vunpack.c.l.b16 %v806
        %v880 = vpack.c.b16 %v849, %v848
        %v881 = vpack.c.b16 %v851, %v850
        %v882 = vpack.c.b16 %v853, %v852
        %v883 = vpack.c.b16 %v855, %v854
        %v884 = vpack.c.b16 %v857, %v856
        %v885 = vpack.c.b16 %v859, %v858
        %v886 = vpack.c.b16 %v861, %v860
        %v887 = vpack.c.b16 %v863, %v862
        %v888 = vpack.c.b16 %v865, %v864
        %v889 = vpack.c.b16 %v867, %v866
        %v890 = vpack.c.b16 %v869, %v868
        %v891 = vpack.c.b16 %v871, %v870
        %v892 = vpack.c.b16 %v873, %v872
        %v893 = vpack.c.b16 %v875, %v874
        %v894 = vpack.c.b16 %v877, %v876
        %v895 = vpack.c.b16 %v879, %v878
        %v898 = vunpack.c.l.b16 %v807
        %v899 = vunpack.c.l.b16 %v808
        %v900 = vpack.c.b16 %v899, %v898
        %vm902 = vcmask 130048
        %v904 = vsel %vm902, %v880, 0
        %v907 = vsel %vm902, %v881, 0
        %v910 = vsel %vm902, %v882, 0
        %v913 = vsel %vm902, %v883, 0
        %v916 = vsel %vm902, %v884, 0
        %v919 = vsel %vm902, %v885, 0
        %v922 = vsel %vm902, %v886, 0
        %v925 = vsel %vm902, %v887, 0
        %v928 = vsel %vm902, %v888, 0
        %v931 = vsel %vm902, %v889, 0
        %v934 = vsel %vm902, %v890, 0
        %v937 = vsel %vm902, %v891, 0
        %v940 = vsel %vm902, %v892, 0
        %v943 = vsel %vm902, %v893, 0
        %v946 = vsel %vm902, %v894, 0
        %v949 = vsel %vm902, %v895, 0
        %951 = vmatprep.subr.bf16.mxu0 0
        %952 = vmatpush1.bf16.msra.mxu0 0
        %953 = vmatprep.subr.bf16.mxu0 0
        %954 = vmatpush1.bf16.msra.mxu0 0
        %955 = vmatprep.subr.bf16.mxu0 0
        %956 = vmatpush1.bf16.msra.mxu0 0
        %957 = vmatprep.subr.bf16.mxu0 0
        %958 = vmatpush1.bf16.msra.mxu0 0
        %959 = vmatprep.subr.bf16.mxu0 0
        %960 = vmatpush1.bf16.msra.mxu0 0
        %961 = vmatprep.subr.bf16.mxu0 0
        %962 = vmatpush1.bf16.msra.mxu0 0
        %963 = vmatprep.subr.bf16.mxu0 0
        %964 = vmatpush1.bf16.msra.mxu0 0
        %965 = vmatprep.subr.bf16.mxu0 0
        %966 = vmatpush1.bf16.msra.mxu0 %v900
        %967 = vmatprep.subr.bf16.mxu0 0
        %968 = vmatpush2.bf16.msra.mxu0 0
        %969 = vmatprep.subr.bf16.mxu0 0
        %970 = vmatpush2.bf16.msra.mxu0 0
        %971 = vmatprep.subr.bf16.mxu0 0
        %972 = vmatpush2.bf16.msra.mxu0 0
        %973 = vmatprep.subr.bf16.mxu0 0
        %974 = vmatpush2.bf16.msra.mxu0 0
        %975 = vmatprep.subr.bf16.mxu0 0
        %976 = vmatpush2.bf16.msra.mxu0 0
        %977 = vmatprep.subr.bf16.mxu0 0
        %978 = vmatpush2.bf16.msra.mxu0 0
        %979 = vmatprep.subr.bf16.mxu0 0
        %980 = vmatpush2.bf16.msra.mxu0 0
        %981 = vmatprep.subr.bf16.mxu0 0
        %982 = vmatpush2.bf16.msra.mxu0 0
        %983 = vmatprep.mubr.bf16.mxu0 0
        %984 = vmatmul.mubr.bf16.gmra.mxu0 %v904
        %v985 = vpop.f32.mrf.mxu0
        %v986 = vadd.f32 %v814, %v985
        %v987 = vpop.f32.mrf.mxu0
        %v988 = vpop.f32.mrf.mxu0
        %v989 = vadd.f32 %v814, %v988
        %v990 = vpop.f32.mrf.mxu0
        %991 = vmatprep.mubr.bf16.mxu0 0
        %992 = vmatmul.mubr.bf16.gmra.mxu0 %v907
        %v993 = vpop.f32.mrf.mxu0
        %v994 = vadd.f32 %v814, %v993
        %v995 = vpop.f32.mrf.mxu0
        %v996 = vpop.f32.mrf.mxu0
        %v997 = vadd.f32 %v814, %v996
        %v998 = vpop.f32.mrf.mxu0
        %999 = vmatprep.mubr.bf16.mxu0 0
        %1000 = vmatmul.mubr.bf16.gmra.mxu0 %v910
        %v1001 = vpop.f32.mrf.mxu0
        %v1002 = vadd.f32 %v814, %v1001
        %v1003 = vpop.f32.mrf.mxu0
        %v1004 = vpop.f32.mrf.mxu0
        %v1005 = vadd.f32 %v814, %v1004
        %v1006 = vpop.f32.mrf.mxu0
        %1007 = vmatprep.mubr.bf16.mxu0 0
        %1008 = vmatmul.mubr.bf16.gmra.mxu0 %v913
        %v1009 = vpop.f32.mrf.mxu0
        %v1010 = vadd.f32 %v814, %v1009
        %v1011 = vpop.f32.mrf.mxu0
        %v1012 = vpop.f32.mrf.mxu0
        %v1013 = vadd.f32 %v814, %v1012
        %v1014 = vpop.f32.mrf.mxu0
        %1015 = vmatprep.mubr.bf16.mxu0 0
        %1016 = vmatmul.mubr.bf16.gmra.mxu0 %v916
        %v1017 = vpop.f32.mrf.mxu0
        %v1018 = vadd.f32 %v814, %v1017
        %v1019 = vpop.f32.mrf.mxu0
        %v1020 = vpop.f32.mrf.mxu0
        %v1021 = vadd.f32 %v814, %v1020
        %v1022 = vpop.f32.mrf.mxu0
        %1023 = vmatprep.mubr.bf16.mxu0 0
        %1024 = vmatmul.mubr.bf16.gmra.mxu0 %v919
        %v1025 = vpop.f32.mrf.mxu0
        %v1026 = vadd.f32 %v814, %v1025
        %v1027 = vpop.f32.mrf.mxu0
        %v1028 = vpop.f32.mrf.mxu0
        %v1029 = vadd.f32 %v814, %v1028
        %v1030 = vpop.f32.mrf.mxu0
        %1031 = vmatprep.mubr.bf16.mxu0 0
        %1032 = vmatmul.mubr.bf16.gmra.mxu0 %v922
        %v1033 = vpop.f32.mrf.mxu0
        %v1034 = vadd.f32 %v814, %v1033
        %v1035 = vpop.f32.mrf.mxu0
        %v1036 = vpop.f32.mrf.mxu0
        %v1037 = vadd.f32 %v814, %v1036
        %v1038 = vpop.f32.mrf.mxu0
        %1039 = vmatprep.mubr.bf16.mxu0 0
        %1040 = vmatmul.mubr.bf16.gmra.mxu0 %v925
        %v1041 = vpop.f32.mrf.mxu0
        %v1042 = vadd.f32 %v814, %v1041
        %v1043 = vpop.f32.mrf.mxu0
        %v1044 = vpop.f32.mrf.mxu0
        %v1045 = vadd.f32 %v814, %v1044
        %v1046 = vpop.f32.mrf.mxu0
        %1047 = vmatprep.mubr.bf16.mxu0 0
        %1048 = vmatmul.mubr.bf16.gmra.mxu0 %v928
        %v1049 = vpop.f32.mrf.mxu0
        %v1050 = vadd.f32 %v814, %v1049
        %v1051 = vpop.f32.mrf.mxu0
        %v1052 = vpop.f32.mrf.mxu0
        %v1053 = vadd.f32 %v814, %v1052
        %v1054 = vpop.f32.mrf.mxu0
        %1055 = vmatprep.mubr.bf16.mxu0 0
        %1056 = vmatmul.mubr.bf16.gmra.mxu0 %v931
        %v1057 = vpop.f32.mrf.mxu0
        %v1058 = vadd.f32 %v814, %v1057
        %v1059 = vpop.f32.mrf.mxu0
        %v1060 = vpop.f32.mrf.mxu0
        %v1061 = vadd.f32 %v814, %v1060
        %v1062 = vpop.f32.mrf.mxu0
        %1063 = vmatprep.mubr.bf16.mxu0 0
        %1064 = vmatmul.mubr.bf16.gmra.mxu0 %v934
        %v1065 = vpop.f32.mrf.mxu0
        %v1066 = vadd.f32 %v814, %v1065
        %v1067 = vpop.f32.mrf.mxu0
        %v1068 = vpop.f32.mrf.mxu0
        %v1069 = vadd.f32 %v814, %v1068
        %v1070 = vpop.f32.mrf.mxu0
        %1071 = vmatprep.mubr.bf16.mxu0 0
        %1072 = vmatmul.mubr.bf16.gmra.mxu0 %v937
        %v1073 = vpop.f32.mrf.mxu0
        %v1074 = vadd.f32 %v814, %v1073
        %v1075 = vpop.f32.mrf.mxu0
        %v1076 = vpop.f32.mrf.mxu0
        %v1077 = vadd.f32 %v814, %v1076
        %v1078 = vpop.f32.mrf.mxu0
        %1079 = vmatprep.mubr.bf16.mxu0 0
        %1080 = vmatmul.mubr.bf16.gmra.mxu0 %v940
        %v1081 = vpop.f32.mrf.mxu0
        %v1082 = vadd.f32 %v814, %v1081
        %v1083 = vpop.f32.mrf.mxu0
        %v1084 = vpop.f32.mrf.mxu0
        %v1085 = vadd.f32 %v814, %v1084
        %v1086 = vpop.f32.mrf.mxu0
        %1087 = vmatprep.mubr.bf16.mxu0 0
        %1088 = vmatmul.mubr.bf16.gmra.mxu0 %v943
        %v1089 = vpop.f32.mrf.mxu0
        %v1090 = vadd.f32 %v814, %v1089
        %v1091 = vpop.f32.mrf.mxu0
        %v1092 = vpop.f32.mrf.mxu0
        %v1093 = vadd.f32 %v814, %v1092
        %v1094 = vpop.f32.mrf.mxu0
        %1095 = vmatprep.mubr.bf16.mxu0 0
        %1096 = vmatmul.mubr.bf16.gmra.mxu0 %v946
        %v1097 = vpop.f32.mrf.mxu0
        %v1098 = vadd.f32 %v814, %v1097
        %v1099 = vpop.f32.mrf.mxu0
        %v1100 = vpop.f32.mrf.mxu0
        %v1101 = vadd.f32 %v814, %v1100
        %v1102 = vpop.f32.mrf.mxu0
        %1103 = vmatprep.mubr.bf16.mxu0 0
        %1104 = vmatmul.mubr.bf16.gmra.mxu0 %v949
        %v1105 = vpop.f32.mrf.mxu0
        %v1106 = vadd.f32 %v814, %v1105
        %v1107 = vpop.f32.mrf.mxu0
        %v1108 = vpop.f32.mrf.mxu0
        %v1109 = vadd.f32 %v814, %v1108
        %v1110 = vpop.f32.mrf.mxu0
        %1111 = vdwg.mxu0
        %v1112 = vxor.u32 %v986, 2147483648
        %v1113 = vxor.u32 %v989, 2147483648
        %v1114 = vxor.u32 %v994, 2147483648
        %v1115 = vxor.u32 %v997, 2147483648
        %v1116 = vxor.u32 %v1002, 2147483648
        %v1117 = vxor.u32 %v1005, 2147483648
        %v1118 = vxor.u32 %v1010, 2147483648
        %v1119 = vxor.u32 %v1013, 2147483648
        %v1120 = vxor.u32 %v1018, 2147483648
        %v1121 = vxor.u32 %v1021, 2147483648
        %v1122 = vxor.u32 %v1026, 2147483648
        %v1123 = vxor.u32 %v1029, 2147483648
        %v1124 = vxor.u32 %v1034, 2147483648
        %v1125 = vxor.u32 %v1037, 2147483648
        %v1126 = vxor.u32 %v1042, 2147483648
        %v1127 = vxor.u32 %v1045, 2147483648
        %v1128 = vxor.u32 %v1050, 2147483648
        %v1129 = vxor.u32 %v1053, 2147483648
        %v1130 = vxor.u32 %v1058, 2147483648
        %v1131 = vxor.u32 %v1061, 2147483648
        %v1132 = vxor.u32 %v1066, 2147483648
        %v1133 = vxor.u32 %v1069, 2147483648
        %v1134 = vxor.u32 %v1074, 2147483648
        %v1135 = vxor.u32 %v1077, 2147483648
        %v1136 = vxor.u32 %v1082, 2147483648
        %v1137 = vxor.u32 %v1085, 2147483648
        %v1138 = vxor.u32 %v1090, 2147483648
        %v1139 = vxor.u32 %v1093, 2147483648
        %v1140 = vxor.u32 %v1098, 2147483648
        %v1141 = vxor.u32 %v1101, 2147483648
        %v1142 = vxor.u32 %v1106, 2147483648
        %v1143 = vxor.u32 %v1109, 2147483648
        %v1144 = vmul.f32 %v1112, 1.442695
        %v1145 = vpow.pop %v1144
        %v1146 = vmul.f32 %v1113, 1.442695
        %v1147 = vpow.pop %v1146
        %v1148 = vmul.f32 %v1114, 1.442695
        %v1149 = vpow.pop %v1148
        %v1150 = vmul.f32 %v1115, 1.442695
        %v1151 = vpow.pop %v1150
        %v1152 = vmul.f32 %v1116, 1.442695
        %v1153 = vpow.pop %v1152
        %v1154 = vmul.f32 %v1117, 1.442695
        %v1155 = vpow.pop %v1154
        %v1156 = vmul.f32 %v1118, 1.442695
        %v1157 = vpow.pop %v1156
        %v1158 = vmul.f32 %v1119, 1.442695
        %v1159 = vpow.pop %v1158
        %v1160 = vmul.f32 %v1120, 1.442695
        %v1161 = vpow.pop %v1160
        %v1162 = vmul.f32 %v1121, 1.442695
        %v1163 = vpow.pop %v1162
        %v1164 = vmul.f32 %v1122, 1.442695
        %v1165 = vpow.pop %v1164
        %v1166 = vmul.f32 %v1123, 1.442695
        %v1167 = vpow.pop %v1166
        %v1168 = vmul.f32 %v1124, 1.442695
        %v1169 = vpow.pop %v1168
        %v1170 = vmul.f32 %v1125, 1.442695
        %v1171 = vpow.pop %v1170
        %v1172 = vmul.f32 %v1126, 1.442695
        %v1173 = vpow.pop %v1172
        %v1174 = vmul.f32 %v1127, 1.442695
        %v1175 = vpow.pop %v1174
        %v1176 = vmul.f32 %v1128, 1.442695
        %v1177 = vpow.pop %v1176
        %v1178 = vmul.f32 %v1129, 1.442695
        %v1179 = vpow.pop %v1178
        %v1180 = vmul.f32 %v1130, 1.442695
        %v1181 = vpow.pop %v1180
        %v1182 = vmul.f32 %v1131, 1.442695
        %v1183 = vpow.pop %v1182
        %v1184 = vmul.f32 %v1132, 1.442695
        %v1185 = vpow.pop %v1184
        %v1186 = vmul.f32 %v1133, 1.442695
        %v1187 = vpow.pop %v1186
        %v1188 = vmul.f32 %v1134, 1.442695
        %v1189 = vpow.pop %v1188
        %v1190 = vmul.f32 %v1135, 1.442695
        %v1191 = vpow.pop %v1190
        %v1192 = vmul.f32 %v1136, 1.442695
        %v1193 = vpow.pop %v1192
        %v1194 = vmul.f32 %v1137, 1.442695
        %v1195 = vpow.pop %v1194
        %v1196 = vmul.f32 %v1138, 1.442695
        %v1197 = vpow.pop %v1196
        %v1198 = vmul.f32 %v1139, 1.442695
        %v1199 = vpow.pop %v1198
        %v1200 = vmul.f32 %v1140, 1.442695
        %v1201 = vpow.pop %v1200
        %v1202 = vmul.f32 %v1141, 1.442695
        %v1203 = vpow.pop %v1202
        %v1204 = vmul.f32 %v1142, 1.442695
        %v1205 = vpow.pop %v1204
        %v1206 = vmul.f32 %v1143, 1.442695
        %v1207 = vpow.pop %v1206
        %v1208 = vadd.f32 %v1145, 1.0
        %v1209 = vadd.f32 %v1147, 1.0
        %v1210 = vadd.f32 %v1149, 1.0
        %v1211 = vadd.f32 %v1151, 1.0
        %v1212 = vadd.f32 %v1153, 1.0
        %v1213 = vadd.f32 %v1155, 1.0
        %v1214 = vadd.f32 %v1157, 1.0
        %v1215 = vadd.f32 %v1159, 1.0
        %v1216 = vadd.f32 %v1161, 1.0
        %v1217 = vadd.f32 %v1163, 1.0
        %v1218 = vadd.f32 %v1165, 1.0
        %v1219 = vadd.f32 %v1167, 1.0
        %v1220 = vadd.f32 %v1169, 1.0
        %v1221 = vadd.f32 %v1171, 1.0
        %v1222 = vadd.f32 %v1173, 1.0
        %v1223 = vadd.f32 %v1175, 1.0
        %v1224 = vadd.f32 %v1177, 1.0
        %v1225 = vadd.f32 %v1179, 1.0
        %v1226 = vadd.f32 %v1181, 1.0
        %v1227 = vadd.f32 %v1183, 1.0
        %v1228 = vadd.f32 %v1185, 1.0
        %v1229 = vadd.f32 %v1187, 1.0
        %v1230 = vadd.f32 %v1189, 1.0
        %v1231 = vadd.f32 %v1191, 1.0
        %v1232 = vadd.f32 %v1193, 1.0
        %v1233 = vadd.f32 %v1195, 1.0
        %v1234 = vadd.f32 %v1197, 1.0
        %v1235 = vadd.f32 %v1199, 1.0
        %v1236 = vadd.f32 %v1201, 1.0
        %v1237 = vadd.f32 %v1203, 1.0
        %v1238 = vadd.f32 %v1205, 1.0
        %v1239 = vadd.f32 %v1207, 1.0
        %v1240 = vrcp.pop %v1208
        %v1241 = vmul.f32 1.0, %v1240
        %v1242 = vrcp.pop %v1209
        %v1243 = vmul.f32 1.0, %v1242
        %v1244 = vrcp.pop %v1210
        %v1245 = vmul.f32 1.0, %v1244
        %v1246 = vrcp.pop %v1211
        %v1247 = vmul.f32 1.0, %v1246
        %v1248 = vrcp.pop %v1212
        %v1249 = vmul.f32 1.0, %v1248
        %v1250 = vrcp.pop %v1213
        %v1251 = vmul.f32 1.0, %v1250
        %v1252 = vrcp.pop %v1214
        %v1253 = vmul.f32 1.0, %v1252
        %v1254 = vrcp.pop %v1215
        %v1255 = vmul.f32 1.0, %v1254
        %v1256 = vrcp.pop %v1216
        %v1257 = vmul.f32 1.0, %v1256
        %v1258 = vrcp.pop %v1217
        %v1259 = vmul.f32 1.0, %v1258
        %v1260 = vrcp.pop %v1218
        %v1261 = vmul.f32 1.0, %v1260
        %v1262 = vrcp.pop %v1219
        %v1263 = vmul.f32 1.0, %v1262
        %v1264 = vrcp.pop %v1220
        %v1265 = vmul.f32 1.0, %v1264
        %v1266 = vrcp.pop %v1221
        %v1267 = vmul.f32 1.0, %v1266
        %v1268 = vrcp.pop %v1222
        %v1269 = vmul.f32 1.0, %v1268
        %v1270 = vrcp.pop %v1223
        %v1271 = vmul.f32 1.0, %v1270
        %v1272 = vrcp.pop %v1224
        %v1273 = vmul.f32 1.0, %v1272
        %v1274 = vrcp.pop %v1225
        %v1275 = vmul.f32 1.0, %v1274
        %v1276 = vrcp.pop %v1226
        %v1277 = vmul.f32 1.0, %v1276
        %v1278 = vrcp.pop %v1227
        %v1279 = vmul.f32 1.0, %v1278
        %v1280 = vrcp.pop %v1228
        %v1281 = vmul.f32 1.0, %v1280
        %v1282 = vrcp.pop %v1229
        %v1283 = vmul.f32 1.0, %v1282
        %v1284 = vrcp.pop %v1230
        %v1285 = vmul.f32 1.0, %v1284
        %v1286 = vrcp.pop %v1231
        %v1287 = vmul.f32 1.0, %v1286
        %v1288 = vrcp.pop %v1232
        %v1289 = vmul.f32 1.0, %v1288
        %v1290 = vrcp.pop %v1233
        %v1291 = vmul.f32 1.0, %v1290
        %v1292 = vrcp.pop %v1234
        %v1293 = vmul.f32 1.0, %v1292
        %v1294 = vrcp.pop %v1235
        %v1295 = vmul.f32 1.0, %v1294
        %v1296 = vrcp.pop %v1236
        %v1297 = vmul.f32 1.0, %v1296
        %v1298 = vrcp.pop %v1237
        %v1299 = vmul.f32 1.0, %v1298
        %v1300 = vrcp.pop %v1238
        %v1301 = vmul.f32 1.0, %v1300
        %v1302 = vrcp.pop %v1239
        %v1303 = vmul.f32 1.0, %v1302
        %v1304 = vld [vmem:[%s418] sm:$0xff]
        %v1305 = vld [vmem:[%s418 + $0x8] sm:$0xff]
        %v1306 = vld [vmem:[%s418 + $0x10] sm:$0xff]
        %v1307 = vld [vmem:[%s418 + $0x18] sm:$0xff]
        %v1308 = vld [vmem:[%s418 + $0x20] sm:$0xff]
        %v1309 = vld [vmem:[%s418 + $0x28] sm:$0xff]
        %v1310 = vld [vmem:[%s418 + $0x30] sm:$0xff]
        %v1311 = vld [vmem:[%s418 + $0x38] sm:$0xff]
        %vm1312 = vnez %v1304
        %vm1313 = vnez %v1305
        %vm1314 = vnez %v1306
        %vm1315 = vnez %v1307
        %vm1316 = vnez %v1308
        %vm1317 = vnez %v1309
        %vm1318 = vnez %v1310
        %vm1319 = vnez %v1311
        %v1320 = vsel %vm1312, 16843009, 0
        %v1321 = vsel %vm1313, 16843009, 0
        %v1322 = vsel %vm1314, 16843009, 0
        %v1323 = vsel %vm1315, 16843009, 0
        %v1324 = vsel %vm1316, 16843009, 0
        %v1325 = vsel %vm1317, 16843009, 0
        %v1326 = vsel %vm1318, 16843009, 0
        %v1327 = vsel %vm1319, 16843009, 0
        %v1328 = vunpack.c.0.s8 %v1320
        %v1329 = vunpack.c.1.s8 %v1320
        %v1330 = vunpack.c.2.s8 %v1320
        %v1331 = vunpack.c.3.s8 %v1320
        %v1332 = vunpack.c.0.s8 %v1321
        %v1333 = vunpack.c.1.s8 %v1321
        %v1334 = vunpack.c.2.s8 %v1321
        %v1335 = vunpack.c.3.s8 %v1321
        %v1336 = vunpack.c.0.s8 %v1322
        %v1337 = vunpack.c.1.s8 %v1322
        %v1338 = vunpack.c.2.s8 %v1322
        %v1339 = vunpack.c.3.s8 %v1322
        %v1340 = vunpack.c.0.s8 %v1323
        %v1341 = vunpack.c.1.s8 %v1323
        %v1342 = vunpack.c.2.s8 %v1323
        %v1343 = vunpack.c.3.s8 %v1323
        %v1344 = vunpack.c.0.s8 %v1324
        %v1345 = vunpack.c.1.s8 %v1324
        %v1346 = vunpack.c.2.s8 %v1324
        %v1347 = vunpack.c.3.s8 %v1324
        %v1348 = vunpack.c.0.s8 %v1325
        %v1349 = vunpack.c.1.s8 %v1325
        %v1350 = vunpack.c.2.s8 %v1325
        %v1351 = vunpack.c.3.s8 %v1325
        %v1352 = vunpack.c.0.s8 %v1326
        %v1353 = vunpack.c.1.s8 %v1326
        %v1354 = vunpack.c.2.s8 %v1326
        %v1355 = vunpack.c.3.s8 %v1326
        %v1356 = vunpack.c.0.s8 %v1327
        %v1357 = vunpack.c.1.s8 %v1327
        %v1358 = vunpack.c.2.s8 %v1327
        %v1359 = vunpack.c.3.s8 %v1327
        %v1360 = vpack.c.b16 %v1328, %v1328
        %v1361 = vpack.c.b8 %v1360, %v1360
        %v1362 = vpack.c.b16 %v1329, %v1329
        %v1363 = vpack.c.b8 %v1362, %v1362
        %v1364 = vpack.c.b16 %v1330, %v1330
        %v1365 = vpack.c.b8 %v1364, %v1364
        %v1366 = vpack.c.b16 %v1331, %v1331
        %v1367 = vpack.c.b8 %v1366, %v1366
        %v1368 = vpack.c.b16 %v1332, %v1332
        %v1369 = vpack.c.b8 %v1368, %v1368
        %v1370 = vpack.c.b16 %v1333, %v1333
        %v1371 = vpack.c.b8 %v1370, %v1370
        %v1372 = vpack.c.b16 %v1334, %v1334
        %v1373 = vpack.c.b8 %v1372, %v1372
        %v1374 = vpack.c.b16 %v1335, %v1335
        %v1375 = vpack.c.b8 %v1374, %v1374
        %v1376 = vpack.c.b16 %v1336, %v1336
        %v1377 = vpack.c.b8 %v1376, %v1376
        %v1378 = vpack.c.b16 %v1337, %v1337
        %v1379 = vpack.c.b8 %v1378, %v1378
        %v1380 = vpack.c.b16 %v1338, %v1338
        %v1381 = vpack.c.b8 %v1380, %v1380
        %v1382 = vpack.c.b16 %v1339, %v1339
        %v1383 = vpack.c.b8 %v1382, %v1382
        %v1384 = vpack.c.b16 %v1340, %v1340
        %v1385 = vpack.c.b8 %v1384, %v1384
        %v1386 = vpack.c.b16 %v1341, %v1341
        %v1387 = vpack.c.b8 %v1386, %v1386
        %v1388 = vpack.c.b16 %v1342, %v1342
        %v1389 = vpack.c.b8 %v1388, %v1388
        %v1390 = vpack.c.b16 %v1343, %v1343
        %v1391 = vpack.c.b8 %v1390, %v1390
        %v1392 = vpack.c.b16 %v1344, %v1344
        %v1393 = vpack.c.b8 %v1392, %v1392
        %v1394 = vpack.c.b16 %v1345, %v1345
        %v1395 = vpack.c.b8 %v1394, %v1394
        %v1396 = vpack.c.b16 %v1346, %v1346
        %v1397 = vpack.c.b8 %v1396, %v1396
        %v1398 = vpack.c.b16 %v1347, %v1347
        %v1399 = vpack.c.b8 %v1398, %v1398
        %v1400 = vpack.c.b16 %v1348, %v1348
        %v1401 = vpack.c.b8 %v1400, %v1400
        %v1402 = vpack.c.b16 %v1349, %v1349
        %v1403 = vpack.c.b8 %v1402, %v1402
        %v1404 = vpack.c.b16 %v1350, %v1350
        %v1405 = vpack.c.b8 %v1404, %v1404
        %v1406 = vpack.c.b16 %v1351, %v1351
        %v1407 = vpack.c.b8 %v1406, %v1406
        %v1408 = vpack.c.b16 %v1352, %v1352
        %v1409 = vpack.c.b8 %v1408, %v1408
        %v1410 = vpack.c.b16 %v1353, %v1353
        %v1411 = vpack.c.b8 %v1410, %v1410
        %v1412 = vpack.c.b16 %v1354, %v1354
        %v1413 = vpack.c.b8 %v1412, %v1412
        %v1414 = vpack.c.b16 %v1355, %v1355
        %v1415 = vpack.c.b8 %v1414, %v1414
        %v1416 = vpack.c.b16 %v1356, %v1356
        %v1417 = vpack.c.b8 %v1416, %v1416
        %v1418 = vpack.c.b16 %v1357, %v1357
        %v1419 = vpack.c.b8 %v1418, %v1418
        %v1420 = vpack.c.b16 %v1358, %v1358
        %v1421 = vpack.c.b8 %v1420, %v1420
        %v1422 = vpack.c.b16 %v1359, %v1359
        %v1423 = vpack.c.b8 %v1422, %v1422
        %vm1424 = vnez %v1361
        %vm1425 = vnez %v1363
        %vm1426 = vnez %v1365
        %vm1427 = vnez %v1367
        %vm1428 = vnez %v1369
        %vm1429 = vnez %v1371
        %vm1430 = vnez %v1373
        %vm1431 = vnez %v1375
        %vm1432 = vnez %v1377
        %vm1433 = vnez %v1379
        %vm1434 = vnez %v1381
        %vm1435 = vnez %v1383
        %vm1436 = vnez %v1385
        %vm1437 = vnez %v1387
        %vm1438 = vnez %v1389
        %vm1439 = vnez %v1391
        %vm1440 = vnez %v1393
        %vm1441 = vnez %v1395
        %vm1442 = vnez %v1397
        %vm1443 = vnez %v1399
        %vm1444 = vnez %v1401
        %vm1445 = vnez %v1403
        %vm1446 = vnez %v1405
        %vm1447 = vnez %v1407
        %vm1448 = vnez %v1409
        %vm1449 = vnez %v1411
        %vm1450 = vnez %v1413
        %vm1451 = vnez %v1415
        %vm1452 = vnez %v1417
        %vm1453 = vnez %v1419
        %vm1454 = vnez %v1421
        %vm1455 = vnez %v1423
        %v1456 = vsel %vm1424, 16843009, 0
        %v1457 = vsel %vm1425, 16843009, 0
        %v1458 = vsel %vm1426, 16843009, 0
        %v1459 = vsel %vm1427, 16843009, 0
        %v1460 = vsel %vm1428, 16843009, 0
        %v1461 = vsel %vm1429, 16843009, 0
        %v1462 = vsel %vm1430, 16843009, 0
        %v1463 = vsel %vm1431, 16843009, 0
        %v1464 = vsel %vm1432, 16843009, 0
        %v1465 = vsel %vm1433, 16843009, 0
        %v1466 = vsel %vm1434, 16843009, 0
        %v1467 = vsel %vm1435, 16843009, 0
        %v1468 = vsel %vm1436, 16843009, 0
        %v1469 = vsel %vm1437, 16843009, 0
        %v1470 = vsel %vm1438, 16843009, 0
        %v1471 = vsel %vm1439, 16843009, 0
        %v1472 = vsel %vm1440, 16843009, 0
        %v1473 = vsel %vm1441, 16843009, 0
        %v1474 = vsel %vm1442, 16843009, 0
        %v1475 = vsel %vm1443, 16843009, 0
        %v1476 = vsel %vm1444, 16843009, 0
        %v1477 = vsel %vm1445, 16843009, 0
        %v1478 = vsel %vm1446, 16843009, 0
        %v1479 = vsel %vm1447, 16843009, 0
        %v1480 = vsel %vm1448, 16843009, 0
        %v1481 = vsel %vm1449, 16843009, 0
        %v1482 = vsel %vm1450, 16843009, 0
        %v1483 = vsel %vm1451, 16843009, 0
        %v1484 = vsel %vm1452, 16843009, 0
        %v1485 = vsel %vm1453, 16843009, 0
        %v1486 = vsel %vm1454, 16843009, 0
        %v1487 = vsel %vm1455, 16843009, 0
        %v1488 = vunpack.c.0.s8 %v1456
        %v1489 = vunpack.c.0.s8 %v1457
        %v1490 = vunpack.c.0.s8 %v1458
        %v1491 = vunpack.c.0.s8 %v1459
        %v1492 = vunpack.c.0.s8 %v1460
        %v1493 = vunpack.c.0.s8 %v1461
        %v1494 = vunpack.c.0.s8 %v1462
        %v1495 = vunpack.c.0.s8 %v1463
        %v1496 = vunpack.c.0.s8 %v1464
        %v1497 = vunpack.c.0.s8 %v1465
        %v1498 = vunpack.c.0.s8 %v1466
        %v1499 = vunpack.c.0.s8 %v1467
        %v1500 = vunpack.c.0.s8 %v1468
        %v1501 = vunpack.c.0.s8 %v1469
        %v1502 = vunpack.c.0.s8 %v1470
        %v1503 = vunpack.c.0.s8 %v1471
        %v1504 = vunpack.c.0.s8 %v1472
        %v1505 = vunpack.c.0.s8 %v1473
        %v1506 = vunpack.c.0.s8 %v1474
        %v1507 = vunpack.c.0.s8 %v1475
        %v1508 = vunpack.c.0.s8 %v1476
        %v1509 = vunpack.c.0.s8 %v1477
        %v1510 = vunpack.c.0.s8 %v1478
        %v1511 = vunpack.c.0.s8 %v1479
        %v1512 = vunpack.c.0.s8 %v1480
        %v1513 = vunpack.c.0.s8 %v1481
        %v1514 = vunpack.c.0.s8 %v1482
        %v1515 = vunpack.c.0.s8 %v1483
        %v1516 = vunpack.c.0.s8 %v1484
        %v1517 = vunpack.c.0.s8 %v1485
        %v1518 = vunpack.c.0.s8 %v1486
        %v1519 = vunpack.c.0.s8 %v1487
        %vm1520 = vcmp.ne.s32.totalorder %v1488, 0
        %vm1521 = vcmp.ne.s32.totalorder %v1489, 0
        %vm1522 = vcmp.ne.s32.totalorder %v1490, 0
        %vm1523 = vcmp.ne.s32.totalorder %v1491, 0
        %vm1524 = vcmp.ne.s32.totalorder %v1492, 0
        %vm1525 = vcmp.ne.s32.totalorder %v1493, 0
        %vm1526 = vcmp.ne.s32.totalorder %v1494, 0
        %vm1527 = vcmp.ne.s32.totalorder %v1495, 0
        %vm1528 = vcmp.ne.s32.totalorder %v1496, 0
        %vm1529 = vcmp.ne.s32.totalorder %v1497, 0
        %vm1530 = vcmp.ne.s32.totalorder %v1498, 0
        %vm1531 = vcmp.ne.s32.totalorder %v1499, 0
        %vm1532 = vcmp.ne.s32.totalorder %v1500, 0
        %vm1533 = vcmp.ne.s32.totalorder %v1501, 0
        %vm1534 = vcmp.ne.s32.totalorder %v1502, 0
        %vm1535 = vcmp.ne.s32.totalorder %v1503, 0
        %vm1536 = vcmp.ne.s32.totalorder %v1504, 0
        %vm1537 = vcmp.ne.s32.totalorder %v1505, 0
        %vm1538 = vcmp.ne.s32.totalorder %v1506, 0
        %vm1539 = vcmp.ne.s32.totalorder %v1507, 0
        %vm1540 = vcmp.ne.s32.totalorder %v1508, 0
        %vm1541 = vcmp.ne.s32.totalorder %v1509, 0
        %vm1542 = vcmp.ne.s32.totalorder %v1510, 0
        %vm1543 = vcmp.ne.s32.totalorder %v1511, 0
        %vm1544 = vcmp.ne.s32.totalorder %v1512, 0
        %vm1545 = vcmp.ne.s32.totalorder %v1513, 0
        %vm1546 = vcmp.ne.s32.totalorder %v1514, 0
        %vm1547 = vcmp.ne.s32.totalorder %v1515, 0
        %vm1548 = vcmp.ne.s32.totalorder %v1516, 0
        %vm1549 = vcmp.ne.s32.totalorder %v1517, 0
        %vm1550 = vcmp.ne.s32.totalorder %v1518, 0
        %vm1551 = vcmp.ne.s32.totalorder %v1519, 0
        %v1552 = vsel %vm1520, %v1241, 0.0
        %v1553 = vsel %vm1521, %v1243, 0.0
        %v1554 = vsel %vm1522, %v1245, 0.0
        %v1555 = vsel %vm1523, %v1247, 0.0
        %v1556 = vsel %vm1524, %v1249, 0.0
        %v1557 = vsel %vm1525, %v1251, 0.0
        %v1558 = vsel %vm1526, %v1253, 0.0
        %v1559 = vsel %vm1527, %v1255, 0.0
        %v1560 = vsel %vm1528, %v1257, 0.0
        %v1561 = vsel %vm1529, %v1259, 0.0
        %v1562 = vsel %vm1530, %v1261, 0.0
        %v1563 = vsel %vm1531, %v1263, 0.0
        %v1564 = vsel %vm1532, %v1265, 0.0
        %v1565 = vsel %vm1533, %v1267, 0.0
        %v1566 = vsel %vm1534, %v1269, 0.0
        %v1567 = vsel %vm1535, %v1271, 0.0
        %v1568 = vsel %vm1536, %v1273, 0.0
        %v1569 = vsel %vm1537, %v1275, 0.0
        %v1570 = vsel %vm1538, %v1277, 0.0
        %v1571 = vsel %vm1539, %v1279, 0.0
        %v1572 = vsel %vm1540, %v1281, 0.0
        %v1573 = vsel %vm1541, %v1283, 0.0
        %v1574 = vsel %vm1542, %v1285, 0.0
        %v1575 = vsel %vm1543, %v1287, 0.0
        %v1576 = vsel %vm1544, %v1289, 0.0
        %v1577 = vsel %vm1545, %v1291, 0.0
        %v1578 = vsel %vm1546, %v1293, 0.0
        %v1579 = vsel %vm1547, %v1295, 0.0
        %v1580 = vsel %vm1548, %v1297, 0.0
        %v1581 = vsel %vm1549, %v1299, 0.0
        %v1582 = vsel %vm1550, %v1301, 0.0
        %v1583 = vsel %vm1551, %v1303, 0.0
        %v1584 = vpack.c.bf16 %v1553, %v1552
        %v1585 = vpack.c.bf16 %v1555, %v1554
        %v1586 = vpack.c.bf16 %v1557, %v1556
        %v1587 = vpack.c.bf16 %v1559, %v1558
        %v1588 = vpack.c.bf16 %v1561, %v1560
        %v1589 = vpack.c.bf16 %v1563, %v1562
        %v1590 = vpack.c.bf16 %v1565, %v1564
        %v1591 = vpack.c.bf16 %v1567, %v1566
        %v1592 = vpack.c.bf16 %v1569, %v1568
        %v1593 = vpack.c.bf16 %v1571, %v1570
        %v1594 = vpack.c.bf16 %v1573, %v1572
        %v1595 = vpack.c.bf16 %v1575, %v1574
        %v1596 = vpack.c.bf16 %v1577, %v1576
        %v1597 = vpack.c.bf16 %v1579, %v1578
        %v1598 = vpack.c.bf16 %v1581, %v1580
        %v1599 = vpack.c.bf16 %v1583, %v1582
        %v1600 = vld [vmem:[%s6] sm:$0xf]
        %v1601 = vld [vmem:[%s6 + $0x4] sm:$0xf]
        %v1602 = vld [vmem:[%s6 + $0x8] sm:$0xf]
        %v1603 = vld [vmem:[%s6 + $0xc] sm:$0xf]
        %v1604 = vld [vmem:[%s6 + $0x10] sm:$0xf]
        %v1605 = vld [vmem:[%s6 + $0x14] sm:$0xf]
        %v1606 = vld [vmem:[%s6 + $0x18] sm:$0xf]
        %v1607 = vld [vmem:[%s6 + $0x1c] sm:$0xf]
        %v1608 = vld [vmem:[%s6 + $0x20] sm:$0xf]
        %v1609 = vld [vmem:[%s6 + $0x24] sm:$0xf]
        %v1610 = vld [vmem:[%s6 + $0x28] sm:$0xf]
        %v1611 = vld [vmem:[%s6 + $0x2c] sm:$0xf]
        %v1612 = vld [vmem:[%s6 + $0x30] sm:$0xf]
        %v1613 = vld [vmem:[%s6 + $0x34] sm:$0xf]
        %v1614 = vld [vmem:[%s6 + $0x38] sm:$0xf]
        %v1615 = vld [vmem:[%s6 + $0x3c] sm:$0xf]
        %v1616 = vld [vmem:[%s7] sm:$0x1]
        %v1618 = vlaneseq
        %v1619 = vshrl.u32 %v1618, 7
        %v1620 = vsub.s32 0, %v1619
        %v1621 = vrot.slane %v1616, %v1620
        %v1639 = vunpack.c.l.b16 %v1600
        %v1640 = vunpack.c.l.b16 %v1601
        %v1641 = vunpack.c.l.b16 %v1602
        %v1642 = vunpack.c.l.b16 %v1603
        %v1643 = vunpack.c.l.b16 %v1604
        %v1644 = vunpack.c.l.b16 %v1605
        %v1645 = vunpack.c.l.b16 %v1606
        %v1646 = vunpack.c.l.b16 %v1607
        %v1647 = vunpack.c.l.b16 %v1608
        %v1648 = vunpack.c.l.b16 %v1609
        %v1649 = vunpack.c.l.b16 %v1610
        %v1650 = vunpack.c.l.b16 %v1611
        %v1651 = vunpack.c.l.b16 %v1612
        %v1652 = vunpack.c.l.b16 %v1613
        %v1653 = vunpack.c.l.b16 %v1614
        %v1654 = vunpack.c.l.b16 %v1615
        %v1655 = vpack.c.b16 %v1640, %v1639
        %v1656 = vpack.c.b16 %v1642, %v1641
        %v1657 = vpack.c.b16 %v1644, %v1643
        %v1658 = vpack.c.b16 %v1646, %v1645
        %v1659 = vpack.c.b16 %v1648, %v1647
        %v1660 = vpack.c.b16 %v1650, %v1649
        %v1661 = vpack.c.b16 %v1652, %v1651
        %v1662 = vpack.c.b16 %v1654, %v1653
        %1671 = vmatprep.subr.bf16.mxu0 0
        %1672 = vmatpush1.bf16.msra.mxu0 %v1662
        %1673 = vmatprep.subr.bf16.mxu0 0
        %1674 = vmatpush1.bf16.msra.mxu0 %v1661
        %1675 = vmatprep.subr.bf16.mxu0 0
        %1676 = vmatpush1.bf16.msra.mxu0 %v1660
        %1677 = vmatprep.subr.bf16.mxu0 0
        %1678 = vmatpush1.bf16.msra.mxu0 %v1659
        %1679 = vmatprep.subr.bf16.mxu0 0
        %1680 = vmatpush1.bf16.msra.mxu0 %v1658
        %1681 = vmatprep.subr.bf16.mxu0 0
        %1682 = vmatpush1.bf16.msra.mxu0 %v1657
        %1683 = vmatprep.subr.bf16.mxu0 0
        %1684 = vmatpush1.bf16.msra.mxu0 %v1656
        %1685 = vmatprep.subr.bf16.mxu0 0
        %1686 = vmatpush1.bf16.msra.mxu0 %v1655
        %1687 = vmatprep.subr.bf16.mxu0 0
        %1688 = vmatpush2.bf16.msra.mxu0 0
        %1689 = vmatprep.subr.bf16.mxu0 0
        %1690 = vmatpush2.bf16.msra.mxu0 0
        %1691 = vmatprep.subr.bf16.mxu0 0
        %1692 = vmatpush2.bf16.msra.mxu0 0
        %1693 = vmatprep.subr.bf16.mxu0 0
        %1694 = vmatpush2.bf16.msra.mxu0 0
        %1695 = vmatprep.subr.bf16.mxu0 0
        %1696 = vmatpush2.bf16.msra.mxu0 0
        %1697 = vmatprep.subr.bf16.mxu0 0
        %1698 = vmatpush2.bf16.msra.mxu0 0
        %1699 = vmatprep.subr.bf16.mxu0 0
        %1700 = vmatpush2.bf16.msra.mxu0 0
        %1701 = vmatprep.subr.bf16.mxu0 0
        %1702 = vmatpush2.bf16.msra.mxu0 0
        %1703 = vmatprep.mubr.bf16.mxu0 0
        %1704 = vmatmul.mubr.bf16.gmra.mxu0 %v1584
        %v1705 = vpop.f32.mrf.mxu0
        %v1706 = vadd.f32 %v1621, %v1705
        %v1707 = vpop.f32.mrf.mxu0
        %v1708 = vpop.f32.mrf.mxu0
        %v1709 = vadd.f32 %v1621, %v1708
        %v1710 = vpop.f32.mrf.mxu0
        %1711 = vmatprep.mubr.bf16.mxu0 0
        %1712 = vmatmul.mubr.bf16.gmra.mxu0 %v1585
        %v1713 = vpop.f32.mrf.mxu0
        %v1714 = vadd.f32 %v1621, %v1713
        %v1715 = vpop.f32.mrf.mxu0
        %v1716 = vpop.f32.mrf.mxu0
        %v1717 = vadd.f32 %v1621, %v1716
        %v1718 = vpop.f32.mrf.mxu0
        %1719 = vmatprep.mubr.bf16.mxu0 0
        %1720 = vmatmul.mubr.bf16.gmra.mxu0 %v1586
        %v1721 = vpop.f32.mrf.mxu0
        %v1722 = vadd.f32 %v1621, %v1721
        %v1723 = vpop.f32.mrf.mxu0
        %v1724 = vpop.f32.mrf.mxu0
        %v1725 = vadd.f32 %v1621, %v1724
        %v1726 = vpop.f32.mrf.mxu0
        %1727 = vmatprep.mubr.bf16.mxu0 0
        %1728 = vmatmul.mubr.bf16.gmra.mxu0 %v1587
        %v1729 = vpop.f32.mrf.mxu0
        %v1730 = vadd.f32 %v1621, %v1729
        %v1731 = vpop.f32.mrf.mxu0
        %v1732 = vpop.f32.mrf.mxu0
        %v1733 = vadd.f32 %v1621, %v1732
        %v1734 = vpop.f32.mrf.mxu0
        %1735 = vmatprep.mubr.bf16.mxu0 0
        %1736 = vmatmul.mubr.bf16.gmra.mxu0 %v1588
        %v1737 = vpop.f32.mrf.mxu0
        %v1738 = vadd.f32 %v1621, %v1737
        %v1739 = vpop.f32.mrf.mxu0
        %v1740 = vpop.f32.mrf.mxu0
        %v1741 = vadd.f32 %v1621, %v1740
        %v1742 = vpop.f32.mrf.mxu0
        %1743 = vmatprep.mubr.bf16.mxu0 0
        %1744 = vmatmul.mubr.bf16.gmra.mxu0 %v1589
        %v1745 = vpop.f32.mrf.mxu0
        %v1746 = vadd.f32 %v1621, %v1745
        %v1747 = vpop.f32.mrf.mxu0
        %v1748 = vpop.f32.mrf.mxu0
        %v1749 = vadd.f32 %v1621, %v1748
        %v1750 = vpop.f32.mrf.mxu0
        %1751 = vmatprep.mubr.bf16.mxu0 0
        %1752 = vmatmul.mubr.bf16.gmra.mxu0 %v1590
        %v1753 = vpop.f32.mrf.mxu0
        %v1754 = vadd.f32 %v1621, %v1753
        %v1755 = vpop.f32.mrf.mxu0
        %v1756 = vpop.f32.mrf.mxu0
        %v1757 = vadd.f32 %v1621, %v1756
        %v1758 = vpop.f32.mrf.mxu0
        %1759 = vmatprep.mubr.bf16.mxu0 0
        %1760 = vmatmul.mubr.bf16.gmra.mxu0 %v1591
        %v1761 = vpop.f32.mrf.mxu0
        %v1762 = vadd.f32 %v1621, %v1761
        %v1763 = vpop.f32.mrf.mxu0
        %v1764 = vpop.f32.mrf.mxu0
        %v1765 = vadd.f32 %v1621, %v1764
        %v1766 = vpop.f32.mrf.mxu0
        %1767 = vmatprep.mubr.bf16.mxu0 0
        %1768 = vmatmul.mubr.bf16.gmra.mxu0 %v1592
        %v1769 = vpop.f32.mrf.mxu0
        %v1770 = vadd.f32 %v1621, %v1769
        %v1771 = vpop.f32.mrf.mxu0
        %v1772 = vpop.f32.mrf.mxu0
        %v1773 = vadd.f32 %v1621, %v1772
        %v1774 = vpop.f32.mrf.mxu0
        %1775 = vmatprep.mubr.bf16.mxu0 0
        %1776 = vmatmul.mubr.bf16.gmra.mxu0 %v1593
        %v1777 = vpop.f32.mrf.mxu0
        %v1778 = vadd.f32 %v1621, %v1777
        %v1779 = vpop.f32.mrf.mxu0
        %v1780 = vpop.f32.mrf.mxu0
        %v1781 = vadd.f32 %v1621, %v1780
        %v1782 = vpop.f32.mrf.mxu0
        %1783 = vmatprep.mubr.bf16.mxu0 0
        %1784 = vmatmul.mubr.bf16.gmra.mxu0 %v1594
        %v1785 = vpop.f32.mrf.mxu0
        %v1786 = vadd.f32 %v1621, %v1785
        %v1787 = vpop.f32.mrf.mxu0
        %v1788 = vpop.f32.mrf.mxu0
        %v1789 = vadd.f32 %v1621, %v1788
        %v1790 = vpop.f32.mrf.mxu0
        %1791 = vmatprep.mubr.bf16.mxu0 0
        %1792 = vmatmul.mubr.bf16.gmra.mxu0 %v1595
        %v1793 = vpop.f32.mrf.mxu0
        %v1794 = vadd.f32 %v1621, %v1793
        %v1795 = vpop.f32.mrf.mxu0
        %v1796 = vpop.f32.mrf.mxu0
        %v1797 = vadd.f32 %v1621, %v1796
        %v1798 = vpop.f32.mrf.mxu0
        %1799 = vmatprep.mubr.bf16.mxu0 0
        %1800 = vmatmul.mubr.bf16.gmra.mxu0 %v1596
        %v1801 = vpop.f32.mrf.mxu0
        %v1802 = vadd.f32 %v1621, %v1801
        %v1803 = vpop.f32.mrf.mxu0
        %v1804 = vpop.f32.mrf.mxu0
        %v1805 = vadd.f32 %v1621, %v1804
        %v1806 = vpop.f32.mrf.mxu0
        %1807 = vmatprep.mubr.bf16.mxu0 0
        %1808 = vmatmul.mubr.bf16.gmra.mxu0 %v1597
        %v1809 = vpop.f32.mrf.mxu0
        %v1810 = vadd.f32 %v1621, %v1809
        %v1811 = vpop.f32.mrf.mxu0
        %v1812 = vpop.f32.mrf.mxu0
        %v1813 = vadd.f32 %v1621, %v1812
        %v1814 = vpop.f32.mrf.mxu0
        %1815 = vmatprep.mubr.bf16.mxu0 0
        %1816 = vmatmul.mubr.bf16.gmra.mxu0 %v1598
        %v1817 = vpop.f32.mrf.mxu0
        %v1818 = vadd.f32 %v1621, %v1817
        %v1819 = vpop.f32.mrf.mxu0
        %v1820 = vpop.f32.mrf.mxu0
        %v1821 = vadd.f32 %v1621, %v1820
        %v1822 = vpop.f32.mrf.mxu0
        %1823 = vmatprep.mubr.bf16.mxu0 0
        %1824 = vmatmul.mubr.bf16.gmra.mxu0 %v1599
        %v1825 = vpop.f32.mrf.mxu0
        %v1826 = vadd.f32 %v1621, %v1825
        %v1827 = vpop.f32.mrf.mxu0
        %v1828 = vpop.f32.mrf.mxu0
        %v1829 = vadd.f32 %v1621, %v1828
        %v1830 = vpop.f32.mrf.mxu0
        %1831 = vdwg.mxu0
        %v1832 = vxor.u32 %v1706, 2147483648
        %v1833 = vxor.u32 %v1709, 2147483648
        %v1834 = vxor.u32 %v1714, 2147483648
        %v1835 = vxor.u32 %v1717, 2147483648
        %v1836 = vxor.u32 %v1722, 2147483648
        %v1837 = vxor.u32 %v1725, 2147483648
        %v1838 = vxor.u32 %v1730, 2147483648
        %v1839 = vxor.u32 %v1733, 2147483648
        %v1840 = vxor.u32 %v1738, 2147483648
        %v1841 = vxor.u32 %v1741, 2147483648
        %v1842 = vxor.u32 %v1746, 2147483648
        %v1843 = vxor.u32 %v1749, 2147483648
        %v1844 = vxor.u32 %v1754, 2147483648
        %v1845 = vxor.u32 %v1757, 2147483648
        %v1846 = vxor.u32 %v1762, 2147483648
        %v1847 = vxor.u32 %v1765, 2147483648
        %v1848 = vxor.u32 %v1770, 2147483648
        %v1849 = vxor.u32 %v1773, 2147483648
        %v1850 = vxor.u32 %v1778, 2147483648
        %v1851 = vxor.u32 %v1781, 2147483648
        %v1852 = vxor.u32 %v1786, 2147483648
        %v1853 = vxor.u32 %v1789, 2147483648
        %v1854 = vxor.u32 %v1794, 2147483648
        %v1855 = vxor.u32 %v1797, 2147483648
        %v1856 = vxor.u32 %v1802, 2147483648
        %v1857 = vxor.u32 %v1805, 2147483648
        %v1858 = vxor.u32 %v1810, 2147483648
        %v1859 = vxor.u32 %v1813, 2147483648
        %v1860 = vxor.u32 %v1818, 2147483648
        %v1861 = vxor.u32 %v1821, 2147483648
        %v1862 = vxor.u32 %v1826, 2147483648
        %v1863 = vxor.u32 %v1829, 2147483648
        %v1864 = vmul.f32 %v1832, 1.442695
        %v1865 = vpow.pop %v1864
        %v1866 = vmul.f32 %v1833, 1.442695
        %v1867 = vpow.pop %v1866
        %v1868 = vmul.f32 %v1834, 1.442695
        %v1869 = vpow.pop %v1868
        %v1870 = vmul.f32 %v1835, 1.442695
        %v1871 = vpow.pop %v1870
        %v1872 = vmul.f32 %v1836, 1.442695
        %v1873 = vpow.pop %v1872
        %v1874 = vmul.f32 %v1837, 1.442695
        %v1875 = vpow.pop %v1874
        %v1876 = vmul.f32 %v1838, 1.442695
        %v1877 = vpow.pop %v1876
        %v1878 = vmul.f32 %v1839, 1.442695
        %v1879 = vpow.pop %v1878
        %v1880 = vmul.f32 %v1840, 1.442695
        %v1881 = vpow.pop %v1880
        %v1882 = vmul.f32 %v1841, 1.442695
        %v1883 = vpow.pop %v1882
        %v1884 = vmul.f32 %v1842, 1.442695
        %v1885 = vpow.pop %v1884
        %v1886 = vmul.f32 %v1843, 1.442695
        %v1887 = vpow.pop %v1886
        %v1888 = vmul.f32 %v1844, 1.442695
        %v1889 = vpow.pop %v1888
        %v1890 = vmul.f32 %v1845, 1.442695
        %v1891 = vpow.pop %v1890
        %v1892 = vmul.f32 %v1846, 1.442695
        %v1893 = vpow.pop %v1892
        %v1894 = vmul.f32 %v1847, 1.442695
        %v1895 = vpow.pop %v1894
        %v1896 = vmul.f32 %v1848, 1.442695
        %v1897 = vpow.pop %v1896
        %v1898 = vmul.f32 %v1849, 1.442695
        %v1899 = vpow.pop %v1898
        %v1900 = vmul.f32 %v1850, 1.442695
        %v1901 = vpow.pop %v1900
        %v1902 = vmul.f32 %v1851, 1.442695
        %v1903 = vpow.pop %v1902
        %v1904 = vmul.f32 %v1852, 1.442695
        %v1905 = vpow.pop %v1904
        %v1906 = vmul.f32 %v1853, 1.442695
        %v1907 = vpow.pop %v1906
        %v1908 = vmul.f32 %v1854, 1.442695
        %v1909 = vpow.pop %v1908
        %v1910 = vmul.f32 %v1855, 1.442695
        %v1911 = vpow.pop %v1910
        %v1912 = vmul.f32 %v1856, 1.442695
        %v1913 = vpow.pop %v1912
        %v1914 = vmul.f32 %v1857, 1.442695
        %v1915 = vpow.pop %v1914
        %v1916 = vmul.f32 %v1858, 1.442695
        %v1917 = vpow.pop %v1916
        %v1918 = vmul.f32 %v1859, 1.442695
        %v1919 = vpow.pop %v1918
        %v1920 = vmul.f32 %v1860, 1.442695
        %v1921 = vpow.pop %v1920
        %v1922 = vmul.f32 %v1861, 1.442695
        %v1923 = vpow.pop %v1922
        %v1924 = vmul.f32 %v1862, 1.442695
        %v1925 = vpow.pop %v1924
        %v1926 = vmul.f32 %v1863, 1.442695
        %v1927 = vpow.pop %v1926
        %v1928 = vadd.f32 %v1865, 1.0
        %v1929 = vadd.f32 %v1867, 1.0
        %v1930 = vadd.f32 %v1869, 1.0
        %v1931 = vadd.f32 %v1871, 1.0
        %v1932 = vadd.f32 %v1873, 1.0
        %v1933 = vadd.f32 %v1875, 1.0
        %v1934 = vadd.f32 %v1877, 1.0
        %v1935 = vadd.f32 %v1879, 1.0
        %v1936 = vadd.f32 %v1881, 1.0
        %v1937 = vadd.f32 %v1883, 1.0
        %v1938 = vadd.f32 %v1885, 1.0
        %v1939 = vadd.f32 %v1887, 1.0
        %v1940 = vadd.f32 %v1889, 1.0
        %v1941 = vadd.f32 %v1891, 1.0
        %v1942 = vadd.f32 %v1893, 1.0
        %v1943 = vadd.f32 %v1895, 1.0
        %v1944 = vadd.f32 %v1897, 1.0
        %v1945 = vadd.f32 %v1899, 1.0
        %v1946 = vadd.f32 %v1901, 1.0
        %v1947 = vadd.f32 %v1903, 1.0
        %v1948 = vadd.f32 %v1905, 1.0
        %v1949 = vadd.f32 %v1907, 1.0
        %v1950 = vadd.f32 %v1909, 1.0
        %v1951 = vadd.f32 %v1911, 1.0
        %v1952 = vadd.f32 %v1913, 1.0
        %v1953 = vadd.f32 %v1915, 1.0
        %v1954 = vadd.f32 %v1917, 1.0
        %v1955 = vadd.f32 %v1919, 1.0
        %v1956 = vadd.f32 %v1921, 1.0
        %v1957 = vadd.f32 %v1923, 1.0
        %v1958 = vadd.f32 %v1925, 1.0
        %v1959 = vadd.f32 %v1927, 1.0
        %v1960 = vrcp.pop %v1928
        %v1961 = vmul.f32 1.0, %v1960
        %v1962 = vrcp.pop %v1929
        %v1963 = vmul.f32 1.0, %v1962
        %v1964 = vrcp.pop %v1930
        %v1965 = vmul.f32 1.0, %v1964
        %v1966 = vrcp.pop %v1931
        %v1967 = vmul.f32 1.0, %v1966
        %v1968 = vrcp.pop %v1932
        %v1969 = vmul.f32 1.0, %v1968
        %v1970 = vrcp.pop %v1933
        %v1971 = vmul.f32 1.0, %v1970
        %v1972 = vrcp.pop %v1934
        %v1973 = vmul.f32 1.0, %v1972
        %v1974 = vrcp.pop %v1935
        %v1975 = vmul.f32 1.0, %v1974
        %v1976 = vrcp.pop %v1936
        %v1977 = vmul.f32 1.0, %v1976
        %v1978 = vrcp.pop %v1937
        %v1979 = vmul.f32 1.0, %v1978
        %v1980 = vrcp.pop %v1938
        %v1981 = vmul.f32 1.0, %v1980
        %v1982 = vrcp.pop %v1939
        %v1983 = vmul.f32 1.0, %v1982
        %v1984 = vrcp.pop %v1940
        %v1985 = vmul.f32 1.0, %v1984
        %v1986 = vrcp.pop %v1941
        %v1987 = vmul.f32 1.0, %v1986
        %v1988 = vrcp.pop %v1942
        %v1989 = vmul.f32 1.0, %v1988
        %v1990 = vrcp.pop %v1943
        %v1991 = vmul.f32 1.0, %v1990
        %v1992 = vrcp.pop %v1944
        %v1993 = vmul.f32 1.0, %v1992
        %v1994 = vrcp.pop %v1945
        %v1995 = vmul.f32 1.0, %v1994
        %v1996 = vrcp.pop %v1946
        %v1997 = vmul.f32 1.0, %v1996
        %v1998 = vrcp.pop %v1947
        %v1999 = vmul.f32 1.0, %v1998
        %v2000 = vrcp.pop %v1948
        %v2001 = vmul.f32 1.0, %v2000
        %v2002 = vrcp.pop %v1949
        %v2003 = vmul.f32 1.0, %v2002
        %v2004 = vrcp.pop %v1950
        %v2005 = vmul.f32 1.0, %v2004
        %v2006 = vrcp.pop %v1951
        %v2007 = vmul.f32 1.0, %v2006
        %v2008 = vrcp.pop %v1952
        %v2009 = vmul.f32 1.0, %v2008
        %v2010 = vrcp.pop %v1953
        %v2011 = vmul.f32 1.0, %v2010
        %v2012 = vrcp.pop %v1954
        %v2013 = vmul.f32 1.0, %v2012
        %v2014 = vrcp.pop %v1955
        %v2015 = vmul.f32 1.0, %v2014
        %v2016 = vrcp.pop %v1956
        %v2017 = vmul.f32 1.0, %v2016
        %v2018 = vrcp.pop %v1957
        %v2019 = vmul.f32 1.0, %v2018
        %v2020 = vrcp.pop %v1958
        %v2021 = vmul.f32 1.0, %v2020
        %v2022 = vrcp.pop %v1959
        %v2023 = vmul.f32 1.0, %v2022
        %v2024 = vld [vmem:[%s424] sm:$0xff]
        %v2025 = vld [vmem:[%s424 + $0x8] sm:$0xff]
        %v2026 = vld [vmem:[%s424 + $0x10] sm:$0xff]
        %v2027 = vld [vmem:[%s424 + $0x18] sm:$0xff]
        %v2028 = vld [vmem:[%s424 + $0x20] sm:$0xff]
        %v2029 = vld [vmem:[%s424 + $0x28] sm:$0xff]
        %v2030 = vld [vmem:[%s424 + $0x30] sm:$0xff]
        %v2031 = vld [vmem:[%s424 + $0x38] sm:$0xff]
        %vm2032 = vnez %v2024
        %vm2033 = vnez %v2025
        %vm2034 = vnez %v2026
        %vm2035 = vnez %v2027
        %vm2036 = vnez %v2028
        %vm2037 = vnez %v2029
        %vm2038 = vnez %v2030
        %vm2039 = vnez %v2031
        %v2040 = vsel %vm2032, 16843009, 0
        %v2041 = vsel %vm2033, 16843009, 0
        %v2042 = vsel %vm2034, 16843009, 0
        %v2043 = vsel %vm2035, 16843009, 0
        %v2044 = vsel %vm2036, 16843009, 0
        %v2045 = vsel %vm2037, 16843009, 0
        %v2046 = vsel %vm2038, 16843009, 0
        %v2047 = vsel %vm2039, 16843009, 0
        %v2048 = vunpack.c.0.s8 %v2040
        %v2049 = vunpack.c.1.s8 %v2040
        %v2050 = vunpack.c.2.s8 %v2040
        %v2051 = vunpack.c.3.s8 %v2040
        %v2052 = vunpack.c.0.s8 %v2041
        %v2053 = vunpack.c.1.s8 %v2041
        %v2054 = vunpack.c.2.s8 %v2041
        %v2055 = vunpack.c.3.s8 %v2041
        %v2056 = vunpack.c.0.s8 %v2042
        %v2057 = vunpack.c.1.s8 %v2042
        %v2058 = vunpack.c.2.s8 %v2042
        %v2059 = vunpack.c.3.s8 %v2042
        %v2060 = vunpack.c.0.s8 %v2043
        %v2061 = vunpack.c.1.s8 %v2043
        %v2062 = vunpack.c.2.s8 %v2043
        %v2063 = vunpack.c.3.s8 %v2043
        %v2064 = vunpack.c.0.s8 %v2044
        %v2065 = vunpack.c.1.s8 %v2044
        %v2066 = vunpack.c.2.s8 %v2044
        %v2067 = vunpack.c.3.s8 %v2044
        %v2068 = vunpack.c.0.s8 %v2045
        %v2069 = vunpack.c.1.s8 %v2045
        %v2070 = vunpack.c.2.s8 %v2045
        %v2071 = vunpack.c.3.s8 %v2045
        %v2072 = vunpack.c.0.s8 %v2046
        %v2073 = vunpack.c.1.s8 %v2046
        %v2074 = vunpack.c.2.s8 %v2046
        %v2075 = vunpack.c.3.s8 %v2046
        %v2076 = vunpack.c.0.s8 %v2047
        %v2077 = vunpack.c.1.s8 %v2047
        %v2078 = vunpack.c.2.s8 %v2047
        %v2079 = vunpack.c.3.s8 %v2047
        %v2080 = vpack.c.b16 %v2048, %v2048
        %v2081 = vpack.c.b8 %v2080, %v2080
        %v2082 = vpack.c.b16 %v2049, %v2049
        %v2083 = vpack.c.b8 %v2082, %v2082
        %v2084 = vpack.c.b16 %v2050, %v2050
        %v2085 = vpack.c.b8 %v2084, %v2084
        %v2086 = vpack.c.b16 %v2051, %v2051
        %v2087 = vpack.c.b8 %v2086, %v2086
        %v2088 = vpack.c.b16 %v2052, %v2052
        %v2089 = vpack.c.b8 %v2088, %v2088
        %v2090 = vpack.c.b16 %v2053, %v2053
        %v2091 = vpack.c.b8 %v2090, %v2090
        %v2092 = vpack.c.b16 %v2054, %v2054
        %v2093 = vpack.c.b8 %v2092, %v2092
        %v2094 = vpack.c.b16 %v2055, %v2055
        %v2095 = vpack.c.b8 %v2094, %v2094
        %v2096 = vpack.c.b16 %v2056, %v2056
        %v2097 = vpack.c.b8 %v2096, %v2096
        %v2098 = vpack.c.b16 %v2057, %v2057
        %v2099 = vpack.c.b8 %v2098, %v2098
        %v2100 = vpack.c.b16 %v2058, %v2058
        %v2101 = vpack.c.b8 %v2100, %v2100
        %v2102 = vpack.c.b16 %v2059, %v2059
        %v2103 = vpack.c.b8 %v2102, %v2102
        %v2104 = vpack.c.b16 %v2060, %v2060
        %v2105 = vpack.c.b8 %v2104, %v2104
        %v2106 = vpack.c.b16 %v2061, %v2061
        %v2107 = vpack.c.b8 %v2106, %v2106
        %v2108 = vpack.c.b16 %v2062, %v2062
        %v2109 = vpack.c.b8 %v2108, %v2108
        %v2110 = vpack.c.b16 %v2063, %v2063
        %v2111 = vpack.c.b8 %v2110, %v2110
        %v2112 = vpack.c.b16 %v2064, %v2064
        %v2113 = vpack.c.b8 %v2112, %v2112
        %v2114 = vpack.c.b16 %v2065, %v2065
        %v2115 = vpack.c.b8 %v2114, %v2114
        %v2116 = vpack.c.b16 %v2066, %v2066
        %v2117 = vpack.c.b8 %v2116, %v2116
        %v2118 = vpack.c.b16 %v2067, %v2067
        %v2119 = vpack.c.b8 %v2118, %v2118
        %v2120 = vpack.c.b16 %v2068, %v2068
        %v2121 = vpack.c.b8 %v2120, %v2120
        %v2122 = vpack.c.b16 %v2069, %v2069
        %v2123 = vpack.c.b8 %v2122, %v2122
        %v2124 = vpack.c.b16 %v2070, %v2070
        %v2125 = vpack.c.b8 %v2124, %v2124
        %v2126 = vpack.c.b16 %v2071, %v2071
        %v2127 = vpack.c.b8 %v2126, %v2126
        %v2128 = vpack.c.b16 %v2072, %v2072
        %v2129 = vpack.c.b8 %v2128, %v2128
        %v2130 = vpack.c.b16 %v2073, %v2073
        %v2131 = vpack.c.b8 %v2130, %v2130
        %v2132 = vpack.c.b16 %v2074, %v2074
        %v2133 = vpack.c.b8 %v2132, %v2132
        %v2134 = vpack.c.b16 %v2075, %v2075
        %v2135 = vpack.c.b8 %v2134, %v2134
        %v2136 = vpack.c.b16 %v2076, %v2076
        %v2137 = vpack.c.b8 %v2136, %v2136
        %v2138 = vpack.c.b16 %v2077, %v2077
        %v2139 = vpack.c.b8 %v2138, %v2138
        %v2140 = vpack.c.b16 %v2078, %v2078
        %v2141 = vpack.c.b8 %v2140, %v2140
        %v2142 = vpack.c.b16 %v2079, %v2079
        %v2143 = vpack.c.b8 %v2142, %v2142
        %vm2144 = vnez %v2081
        %vm2145 = vnez %v2083
        %vm2146 = vnez %v2085
        %vm2147 = vnez %v2087
        %vm2148 = vnez %v2089
        %vm2149 = vnez %v2091
        %vm2150 = vnez %v2093
        %vm2151 = vnez %v2095
        %vm2152 = vnez %v2097
        %vm2153 = vnez %v2099
        %vm2154 = vnez %v2101
        %vm2155 = vnez %v2103
        %vm2156 = vnez %v2105
        %vm2157 = vnez %v2107
        %vm2158 = vnez %v2109
        %vm2159 = vnez %v2111
        %vm2160 = vnez %v2113
        %vm2161 = vnez %v2115
        %vm2162 = vnez %v2117
        %vm2163 = vnez %v2119
        %vm2164 = vnez %v2121
        %vm2165 = vnez %v2123
        %vm2166 = vnez %v2125
        %vm2167 = vnez %v2127
        %vm2168 = vnez %v2129
        %vm2169 = vnez %v2131
        %vm2170 = vnez %v2133
        %vm2171 = vnez %v2135
        %vm2172 = vnez %v2137
        %vm2173 = vnez %v2139
        %vm2174 = vnez %v2141
        %vm2175 = vnez %v2143
        %v2176 = vsel %vm2144, 16843009, 0
        %v2177 = vsel %vm2145, 16843009, 0
        %v2178 = vsel %vm2146, 16843009, 0
        %v2179 = vsel %vm2147, 16843009, 0
        %v2180 = vsel %vm2148, 16843009, 0
        %v2181 = vsel %vm2149, 16843009, 0
        %v2182 = vsel %vm2150, 16843009, 0
        %v2183 = vsel %vm2151, 16843009, 0
        %v2184 = vsel %vm2152, 16843009, 0
        %v2185 = vsel %vm2153, 16843009, 0
        %v2186 = vsel %vm2154, 16843009, 0
        %v2187 = vsel %vm2155, 16843009, 0
        %v2188 = vsel %vm2156, 16843009, 0
        %v2189 = vsel %vm2157, 16843009, 0
        %v2190 = vsel %vm2158, 16843009, 0
        %v2191 = vsel %vm2159, 16843009, 0
        %v2192 = vsel %vm2160, 16843009, 0
        %v2193 = vsel %vm2161, 16843009, 0
        %v2194 = vsel %vm2162, 16843009, 0
        %v2195 = vsel %vm2163, 16843009, 0
        %v2196 = vsel %vm2164, 16843009, 0
        %v2197 = vsel %vm2165, 16843009, 0
        %v2198 = vsel %vm2166, 16843009, 0
        %v2199 = vsel %vm2167, 16843009, 0
        %v2200 = vsel %vm2168, 16843009, 0
        %v2201 = vsel %vm2169, 16843009, 0
        %v2202 = vsel %vm2170, 16843009, 0
        %v2203 = vsel %vm2171, 16843009, 0
        %v2204 = vsel %vm2172, 16843009, 0
        %v2205 = vsel %vm2173, 16843009, 0
        %v2206 = vsel %vm2174, 16843009, 0
        %v2207 = vsel %vm2175, 16843009, 0
        %v2208 = vunpack.c.0.s8 %v2176
        %v2209 = vunpack.c.0.s8 %v2177
        %v2210 = vunpack.c.0.s8 %v2178
        %v2211 = vunpack.c.0.s8 %v2179
        %v2212 = vunpack.c.0.s8 %v2180
        %v2213 = vunpack.c.0.s8 %v2181
        %v2214 = vunpack.c.0.s8 %v2182
        %v2215 = vunpack.c.0.s8 %v2183
        %v2216 = vunpack.c.0.s8 %v2184
        %v2217 = vunpack.c.0.s8 %v2185
        %v2218 = vunpack.c.0.s8 %v2186
        %v2219 = vunpack.c.0.s8 %v2187
        %v2220 = vunpack.c.0.s8 %v2188
        %v2221 = vunpack.c.0.s8 %v2189
        %v2222 = vunpack.c.0.s8 %v2190
        %v2223 = vunpack.c.0.s8 %v2191
        %v2224 = vunpack.c.0.s8 %v2192
        %v2225 = vunpack.c.0.s8 %v2193
        %v2226 = vunpack.c.0.s8 %v2194
        %v2227 = vunpack.c.0.s8 %v2195
        %v2228 = vunpack.c.0.s8 %v2196
        %v2229 = vunpack.c.0.s8 %v2197
        %v2230 = vunpack.c.0.s8 %v2198
        %v2231 = vunpack.c.0.s8 %v2199
        %v2232 = vunpack.c.0.s8 %v2200
        %v2233 = vunpack.c.0.s8 %v2201
        %v2234 = vunpack.c.0.s8 %v2202
        %v2235 = vunpack.c.0.s8 %v2203
        %v2236 = vunpack.c.0.s8 %v2204
        %v2237 = vunpack.c.0.s8 %v2205
        %v2238 = vunpack.c.0.s8 %v2206
        %v2239 = vunpack.c.0.s8 %v2207
        %vm2240 = vcmp.ne.s32.totalorder %v2208, 0
        %vm2241 = vcmp.ne.s32.totalorder %v2209, 0
        %vm2242 = vcmp.ne.s32.totalorder %v2210, 0
        %vm2243 = vcmp.ne.s32.totalorder %v2211, 0
        %vm2244 = vcmp.ne.s32.totalorder %v2212, 0
        %vm2245 = vcmp.ne.s32.totalorder %v2213, 0
        %vm2246 = vcmp.ne.s32.totalorder %v2214, 0
        %vm2247 = vcmp.ne.s32.totalorder %v2215, 0
        %vm2248 = vcmp.ne.s32.totalorder %v2216, 0
        %vm2249 = vcmp.ne.s32.totalorder %v2217, 0
        %vm2250 = vcmp.ne.s32.totalorder %v2218, 0
        %vm2251 = vcmp.ne.s32.totalorder %v2219, 0
        %vm2252 = vcmp.ne.s32.totalorder %v2220, 0
        %vm2253 = vcmp.ne.s32.totalorder %v2221, 0
        %vm2254 = vcmp.ne.s32.totalorder %v2222, 0
        %vm2255 = vcmp.ne.s32.totalorder %v2223, 0
        %vm2256 = vcmp.ne.s32.totalorder %v2224, 0
        %vm2257 = vcmp.ne.s32.totalorder %v2225, 0
        %vm2258 = vcmp.ne.s32.totalorder %v2226, 0
        %vm2259 = vcmp.ne.s32.totalorder %v2227, 0
        %vm2260 = vcmp.ne.s32.totalorder %v2228, 0
        %vm2261 = vcmp.ne.s32.totalorder %v2229, 0
        %vm2262 = vcmp.ne.s32.totalorder %v2230, 0
        %vm2263 = vcmp.ne.s32.totalorder %v2231, 0
        %vm2264 = vcmp.ne.s32.totalorder %v2232, 0
        %vm2265 = vcmp.ne.s32.totalorder %v2233, 0
        %vm2266 = vcmp.ne.s32.totalorder %v2234, 0
        %vm2267 = vcmp.ne.s32.totalorder %v2235, 0
        %vm2268 = vcmp.ne.s32.totalorder %v2236, 0
        %vm2269 = vcmp.ne.s32.totalorder %v2237, 0
        %vm2270 = vcmp.ne.s32.totalorder %v2238, 0
        %vm2271 = vcmp.ne.s32.totalorder %v2239, 0
        %v2272 = vsel %vm2240, %v1961, 0.0
        %v2273 = vsel %vm2241, %v1963, 0.0
        %v2274 = vsel %vm2242, %v1965, 0.0
        %v2275 = vsel %vm2243, %v1967, 0.0
        %v2276 = vsel %vm2244, %v1969, 0.0
        %v2277 = vsel %vm2245, %v1971, 0.0
        %v2278 = vsel %vm2246, %v1973, 0.0
        %v2279 = vsel %vm2247, %v1975, 0.0
        %v2280 = vsel %vm2248, %v1977, 0.0
        %v2281 = vsel %vm2249, %v1979, 0.0
        %v2282 = vsel %vm2250, %v1981, 0.0
        %v2283 = vsel %vm2251, %v1983, 0.0
        %v2284 = vsel %vm2252, %v1985, 0.0
        %v2285 = vsel %vm2253, %v1987, 0.0
        %v2286 = vsel %vm2254, %v1989, 0.0
        %v2287 = vsel %vm2255, %v1991, 0.0
        %v2288 = vsel %vm2256, %v1993, 0.0
        %v2289 = vsel %vm2257, %v1995, 0.0
        %v2290 = vsel %vm2258, %v1997, 0.0
        %v2291 = vsel %vm2259, %v1999, 0.0
        %v2292 = vsel %vm2260, %v2001, 0.0
        %v2293 = vsel %vm2261, %v2003, 0.0
        %v2294 = vsel %vm2262, %v2005, 0.0
        %v2295 = vsel %vm2263, %v2007, 0.0
        %v2296 = vsel %vm2264, %v2009, 0.0
        %v2297 = vsel %vm2265, %v2011, 0.0
        %v2298 = vsel %vm2266, %v2013, 0.0
        %v2299 = vsel %vm2267, %v2015, 0.0
        %v2300 = vsel %vm2268, %v2017, 0.0
        %v2301 = vsel %vm2269, %v2019, 0.0
        %v2302 = vsel %vm2270, %v2021, 0.0
        %v2303 = vsel %vm2271, %v2023, 0.0
        %v2304 = vpack.c.bf16 %v2273, %v2272
        %v2305 = vpack.c.bf16 %v2275, %v2274
        %v2306 = vpack.c.bf16 %v2277, %v2276
        %v2307 = vpack.c.bf16 %v2279, %v2278
        %v2308 = vpack.c.bf16 %v2281, %v2280
        %v2309 = vpack.c.bf16 %v2283, %v2282
        %v2310 = vpack.c.bf16 %v2285, %v2284
        %v2311 = vpack.c.bf16 %v2287, %v2286
        %v2312 = vpack.c.bf16 %v2289, %v2288
        %v2313 = vpack.c.bf16 %v2291, %v2290
        %v2314 = vpack.c.bf16 %v2293, %v2292
        %v2315 = vpack.c.bf16 %v2295, %v2294
        %v2316 = vpack.c.bf16 %v2297, %v2296
        %v2317 = vpack.c.bf16 %v2299, %v2298
        %v2318 = vpack.c.bf16 %v2301, %v2300
        %v2319 = vpack.c.bf16 %v2303, %v2302
        %v2320 = vld [vmem:[%s8] sm:$0xf]
        %v2321 = vld [vmem:[%s8 + $0x4] sm:$0xf]
        %v2322 = vld [vmem:[%s8 + $0x8] sm:$0xf]
        %v2323 = vld [vmem:[%s8 + $0xc] sm:$0xf]
        %v2324 = vld [vmem:[%s8 + $0x10] sm:$0xf]
        %v2325 = vld [vmem:[%s8 + $0x14] sm:$0xf]
        %v2326 = vld [vmem:[%s8 + $0x18] sm:$0xf]
        %v2327 = vld [vmem:[%s8 + $0x1c] sm:$0xf]
        %v2328 = vld [vmem:[%s8 + $0x20] sm:$0xf]
        %v2329 = vld [vmem:[%s8 + $0x24] sm:$0xf]
        %v2330 = vld [vmem:[%s8 + $0x28] sm:$0xf]
        %v2331 = vld [vmem:[%s8 + $0x2c] sm:$0xf]
        %v2332 = vld [vmem:[%s8 + $0x30] sm:$0xf]
        %v2333 = vld [vmem:[%s8 + $0x34] sm:$0xf]
        %v2334 = vld [vmem:[%s8 + $0x38] sm:$0xf]
        %v2335 = vld [vmem:[%s8 + $0x3c] sm:$0xf]
        %v2336 = vld [vmem:[%s9] sm:$0x1]
        %v2338 = vlaneseq
        %v2339 = vshrl.u32 %v2338, 7
        %v2340 = vsub.s32 0, %v2339
        %v2341 = vrot.slane %v2336, %v2340
        %v2359 = vunpack.c.l.b16 %v2320
        %v2360 = vunpack.c.l.b16 %v2321
        %v2361 = vunpack.c.l.b16 %v2322
        %v2362 = vunpack.c.l.b16 %v2323
        %v2363 = vunpack.c.l.b16 %v2324
        %v2364 = vunpack.c.l.b16 %v2325
        %v2365 = vunpack.c.l.b16 %v2326
        %v2366 = vunpack.c.l.b16 %v2327
        %v2367 = vunpack.c.l.b16 %v2328
        %v2368 = vunpack.c.l.b16 %v2329
        %v2369 = vunpack.c.l.b16 %v2330
        %v2370 = vunpack.c.l.b16 %v2331
        %v2371 = vunpack.c.l.b16 %v2332
        %v2372 = vunpack.c.l.b16 %v2333
        %v2373 = vunpack.c.l.b16 %v2334
        %v2374 = vunpack.c.l.b16 %v2335
        %v2375 = vpack.c.b16 %v2360, %v2359
        %v2376 = vpack.c.b16 %v2362, %v2361
        %v2377 = vpack.c.b16 %v2364, %v2363
        %v2378 = vpack.c.b16 %v2366, %v2365
        %v2379 = vpack.c.b16 %v2368, %v2367
        %v2380 = vpack.c.b16 %v2370, %v2369
        %v2381 = vpack.c.b16 %v2372, %v2371
        %v2382 = vpack.c.b16 %v2374, %v2373
        %2391 = vmatprep.subr.bf16.mxu0 0
        %2392 = vmatpush1.bf16.msra.mxu0 %v2382
        %2393 = vmatprep.subr.bf16.mxu0 0
        %2394 = vmatpush1.bf16.msra.mxu0 %v2381
        %2395 = vmatprep.subr.bf16.mxu0 0
        %2396 = vmatpush1.bf16.msra.mxu0 %v2380
        %2397 = vmatprep.subr.bf16.mxu0 0
        %2398 = vmatpush1.bf16.msra.mxu0 %v2379
        %2399 = vmatprep.subr.bf16.mxu0 0
        %2400 = vmatpush1.bf16.msra.mxu0 %v2378
        %2401 = vmatprep.subr.bf16.mxu0 0
        %2402 = vmatpush1.bf16.msra.mxu0 %v2377
        %2403 = vmatprep.subr.bf16.mxu0 0
        %2404 = vmatpush1.bf16.msra.mxu0 %v2376
        %2405 = vmatprep.subr.bf16.mxu0 0
        %2406 = vmatpush1.bf16.msra.mxu0 %v2375
        %2407 = vmatprep.subr.bf16.mxu0 0
        %2408 = vmatpush2.bf16.msra.mxu0 0
        %2409 = vmatprep.subr.bf16.mxu0 0
        %2410 = vmatpush2.bf16.msra.mxu0 0
        %2411 = vmatprep.subr.bf16.mxu0 0
        %2412 = vmatpush2.bf16.msra.mxu0 0
        %2413 = vmatprep.subr.bf16.mxu0 0
        %2414 = vmatpush2.bf16.msra.mxu0 0
        %2415 = vmatprep.subr.bf16.mxu0 0
        %2416 = vmatpush2.bf16.msra.mxu0 0
        %2417 = vmatprep.subr.bf16.mxu0 0
        %2418 = vmatpush2.bf16.msra.mxu0 0
        %2419 = vmatprep.subr.bf16.mxu0 0
        %2420 = vmatpush2.bf16.msra.mxu0 0
        %2421 = vmatprep.subr.bf16.mxu0 0
        %2422 = vmatpush2.bf16.msra.mxu0 0
        %2423 = vmatprep.mubr.bf16.mxu0 0
        %2424 = vmatmul.mubr.bf16.gmra.mxu0 %v2304
        %v2425 = vpop.f32.mrf.mxu0
        %v2426 = vadd.f32 %v2341, %v2425
        %v2427 = vpop.f32.mrf.mxu0
        %v2428 = vpop.f32.mrf.mxu0
        %v2429 = vadd.f32 %v2341, %v2428
        %v2430 = vpop.f32.mrf.mxu0
        %2431 = vmatprep.mubr.bf16.mxu0 0
        %2432 = vmatmul.mubr.bf16.gmra.mxu0 %v2305
        %v2433 = vpop.f32.mrf.mxu0
        %v2434 = vadd.f32 %v2341, %v2433
        %v2435 = vpop.f32.mrf.mxu0
        %v2436 = vpop.f32.mrf.mxu0
        %v2437 = vadd.f32 %v2341, %v2436
        %v2438 = vpop.f32.mrf.mxu0
        %2439 = vmatprep.mubr.bf16.mxu0 0
        %2440 = vmatmul.mubr.bf16.gmra.mxu0 %v2306
        %v2441 = vpop.f32.mrf.mxu0
        %v2442 = vadd.f32 %v2341, %v2441
        %v2443 = vpop.f32.mrf.mxu0
        %v2444 = vpop.f32.mrf.mxu0
        %v2445 = vadd.f32 %v2341, %v2444
        %v2446 = vpop.f32.mrf.mxu0
        %2447 = vmatprep.mubr.bf16.mxu0 0
        %2448 = vmatmul.mubr.bf16.gmra.mxu0 %v2307
        %v2449 = vpop.f32.mrf.mxu0
        %v2450 = vadd.f32 %v2341, %v2449
        %v2451 = vpop.f32.mrf.mxu0
        %v2452 = vpop.f32.mrf.mxu0
        %v2453 = vadd.f32 %v2341, %v2452
        %v2454 = vpop.f32.mrf.mxu0
        %2455 = vmatprep.mubr.bf16.mxu0 0
        %2456 = vmatmul.mubr.bf16.gmra.mxu0 %v2308
        %v2457 = vpop.f32.mrf.mxu0
        %v2458 = vadd.f32 %v2341, %v2457
        %v2459 = vpop.f32.mrf.mxu0
        %v2460 = vpop.f32.mrf.mxu0
        %v2461 = vadd.f32 %v2341, %v2460
        %v2462 = vpop.f32.mrf.mxu0
        %2463 = vmatprep.mubr.bf16.mxu0 0
        %2464 = vmatmul.mubr.bf16.gmra.mxu0 %v2309
        %v2465 = vpop.f32.mrf.mxu0
        %v2466 = vadd.f32 %v2341, %v2465
        %v2467 = vpop.f32.mrf.mxu0
        %v2468 = vpop.f32.mrf.mxu0
        %v2469 = vadd.f32 %v2341, %v2468
        %v2470 = vpop.f32.mrf.mxu0
        %2471 = vmatprep.mubr.bf16.mxu0 0
        %2472 = vmatmul.mubr.bf16.gmra.mxu0 %v2310
        %v2473 = vpop.f32.mrf.mxu0
        %v2474 = vadd.f32 %v2341, %v2473
        %v2475 = vpop.f32.mrf.mxu0
        %v2476 = vpop.f32.mrf.mxu0
        %v2477 = vadd.f32 %v2341, %v2476
        %v2478 = vpop.f32.mrf.mxu0
        %2479 = vmatprep.mubr.bf16.mxu0 0
        %2480 = vmatmul.mubr.bf16.gmra.mxu0 %v2311
        %v2481 = vpop.f32.mrf.mxu0
        %v2482 = vadd.f32 %v2341, %v2481
        %v2483 = vpop.f32.mrf.mxu0
        %v2484 = vpop.f32.mrf.mxu0
        %v2485 = vadd.f32 %v2341, %v2484
        %v2486 = vpop.f32.mrf.mxu0
        %2487 = vmatprep.mubr.bf16.mxu0 0
        %2488 = vmatmul.mubr.bf16.gmra.mxu0 %v2312
        %v2489 = vpop.f32.mrf.mxu0
        %v2490 = vadd.f32 %v2341, %v2489
        %v2491 = vpop.f32.mrf.mxu0
        %v2492 = vpop.f32.mrf.mxu0
        %v2493 = vadd.f32 %v2341, %v2492
        %v2494 = vpop.f32.mrf.mxu0
        %2495 = vmatprep.mubr.bf16.mxu0 0
        %2496 = vmatmul.mubr.bf16.gmra.mxu0 %v2313
        %v2497 = vpop.f32.mrf.mxu0
        %v2498 = vadd.f32 %v2341, %v2497
        %v2499 = vpop.f32.mrf.mxu0
        %v2500 = vpop.f32.mrf.mxu0
        %v2501 = vadd.f32 %v2341, %v2500
        %v2502 = vpop.f32.mrf.mxu0
        %2503 = vmatprep.mubr.bf16.mxu0 0
        %2504 = vmatmul.mubr.bf16.gmra.mxu0 %v2314
        %v2505 = vpop.f32.mrf.mxu0
        %v2506 = vadd.f32 %v2341, %v2505
        %v2507 = vpop.f32.mrf.mxu0
        %v2508 = vpop.f32.mrf.mxu0
        %v2509 = vadd.f32 %v2341, %v2508
        %v2510 = vpop.f32.mrf.mxu0
        %2511 = vmatprep.mubr.bf16.mxu0 0
        %2512 = vmatmul.mubr.bf16.gmra.mxu0 %v2315
        %v2513 = vpop.f32.mrf.mxu0
        %v2514 = vadd.f32 %v2341, %v2513
        %v2515 = vpop.f32.mrf.mxu0
        %v2516 = vpop.f32.mrf.mxu0
        %v2517 = vadd.f32 %v2341, %v2516
        %v2518 = vpop.f32.mrf.mxu0
        %2519 = vmatprep.mubr.bf16.mxu0 0
        %2520 = vmatmul.mubr.bf16.gmra.mxu0 %v2316
        %v2521 = vpop.f32.mrf.mxu0
        %v2522 = vadd.f32 %v2341, %v2521
        %v2523 = vpop.f32.mrf.mxu0
        %v2524 = vpop.f32.mrf.mxu0
        %v2525 = vadd.f32 %v2341, %v2524
        %v2526 = vpop.f32.mrf.mxu0
        %2527 = vmatprep.mubr.bf16.mxu0 0
        %2528 = vmatmul.mubr.bf16.gmra.mxu0 %v2317
        %v2529 = vpop.f32.mrf.mxu0
        %v2530 = vadd.f32 %v2341, %v2529
        %v2531 = vpop.f32.mrf.mxu0
        %v2532 = vpop.f32.mrf.mxu0
        %v2533 = vadd.f32 %v2341, %v2532
        %v2534 = vpop.f32.mrf.mxu0
        %2535 = vmatprep.mubr.bf16.mxu0 0
        %2536 = vmatmul.mubr.bf16.gmra.mxu0 %v2318
        %v2537 = vpop.f32.mrf.mxu0
        %v2538 = vadd.f32 %v2341, %v2537
        %v2539 = vpop.f32.mrf.mxu0
        %v2540 = vpop.f32.mrf.mxu0
        %v2541 = vadd.f32 %v2341, %v2540
        %v2542 = vpop.f32.mrf.mxu0
        %2543 = vmatprep.mubr.bf16.mxu0 0
        %2544 = vmatmul.mubr.bf16.gmra.mxu0 %v2319
        %v2545 = vpop.f32.mrf.mxu0
        %v2546 = vadd.f32 %v2341, %v2545
        %v2547 = vpop.f32.mrf.mxu0
        %v2548 = vpop.f32.mrf.mxu0
        %v2549 = vadd.f32 %v2341, %v2548
        %v2550 = vpop.f32.mrf.mxu0
        %2551 = vdwg.mxu0
        %2552 = vst [vmem:[%s401] sm:$0xff] %v2426
        %2553 = vst [vmem:[%s401 + $0x8] sm:$0xff] %v2429
        %2554 = vst [vmem:[%s401 + $0x10] sm:$0xff] %v2434
        %2555 = vst [vmem:[%s401 + $0x18] sm:$0xff] %v2437
        %2556 = vst [vmem:[%s401 + $0x20] sm:$0xff] %v2442
        %2557 = vst [vmem:[%s401 + $0x28] sm:$0xff] %v2445
        %2558 = vst [vmem:[%s401 + $0x30] sm:$0xff] %v2450
        %2559 = vst [vmem:[%s401 + $0x38] sm:$0xff] %v2453
        %2560 = vst [vmem:[%s401 + $0x40] sm:$0xff] %v2458
        %2561 = vst [vmem:[%s401 + $0x48] sm:$0xff] %v2461
        %2562 = vst [vmem:[%s401 + $0x50] sm:$0xff] %v2466
        %2563 = vst [vmem:[%s401 + $0x58] sm:$0xff] %v2469
        %2564 = vst [vmem:[%s401 + $0x60] sm:$0xff] %v2474
        %2565 = vst [vmem:[%s401 + $0x68] sm:$0xff] %v2477
        %2566 = vst [vmem:[%s401 + $0x70] sm:$0xff] %v2482
        %2567 = vst [vmem:[%s401 + $0x78] sm:$0xff] %v2485
        %2568 = vst [vmem:[%s401 + $0x80] sm:$0xff] %v2490
        %2569 = vst [vmem:[%s401 + $0x88] sm:$0xff] %v2493
        %2570 = vst [vmem:[%s401 + $0x90] sm:$0xff] %v2498
        %2571 = vst [vmem:[%s401 + $0x98] sm:$0xff] %v2501
        %2572 = vst [vmem:[%s401 + $0xa0] sm:$0xff] %v2506
        %2573 = vst [vmem:[%s401 + $0xa8] sm:$0xff] %v2509
        %2574 = vst [vmem:[%s401 + $0xb0] sm:$0xff] %v2514
        %2575 = vst [vmem:[%s401 + $0xb8] sm:$0xff] %v2517
        %2576 = vst [vmem:[%s401 + $0xc0] sm:$0xff] %v2522
        %2577 = vst [vmem:[%s401 + $0xc8] sm:$0xff] %v2525
        %2578 = vst [vmem:[%s401 + $0xd0] sm:$0xff] %v2530
        %2579 = vst [vmem:[%s401 + $0xd8] sm:$0xff] %v2533
        %2580 = vst [vmem:[%s401 + $0xe0] sm:$0xff] %v2538
        %2581 = vst [vmem:[%s401 + $0xe8] sm:$0xff] %v2541
        %2582 = vst [vmem:[%s401 + $0xf0] sm:$0xff] %v2546
        %2583 = vst [vmem:[%s401 + $0xf8] sm:$0xff] %v2549
        %s2584 = sand.u32 %s262, 1
        %s2585 = scalar_lea.sflag [#allocation3], %s2584
        %s2586 = sand.u32 %s262, 1
        %s2587 = smul.addr %s2586, 256
        %s2588 = scalar_lea.vmem [#allocation2], %s2587
        // Predicated region
        $region61: #{tpu_custom_call.1} parent=59 // pred_check
          %p2589 = pneg %p272
        $region62: #{tpu_custom_call.1} parent=59 // pred_check_branch
          %2591 = sbr.rel (%p2589) target = $region64
        $region63: #{tpu_custom_call.1} parent=59 // pred_region
          %s2592 = smul.u32 32, %s24
          %s2594 = ssub.s32 4096, 4096
          %2595 = vsyncadd %s2585, %s2594
          %s2596 = smul.addr %s2592, 128
          %s2597 = scalar_lea.hbm %s10, %s2596
          %s2598 = sshll.u32 %s2588, 4
          %s2599 = int_to_ptr.vmem [resolvable:$true] %s2598
          %2604 = dma.vmem_to_hbm [thread:$0]  %s2599, 4096, %s2597, %s2585, 128, 128, 8
        $region64: #{tpu_custom_call.1} parent=59 // pred_fallthru
          _
      $region60: #{tpu_custom_call.1} parent=5 // pred_fallthru
        _
      %p2605 = scmp.le.s32.totalorder 2, %s19
      // Predicated region
      $region65: #{tpu_custom_call.1} parent=5 // pred_check
        %p2606 = pneg %p2605
      $region66: #{tpu_custom_call.1} parent=5 // pred_check_branch
        %2608 = sbr.rel (%p2606) target = $region68
      $region67: #{tpu_custom_call.1} parent=5 // pred_region
        %s2609 = ssub.s32 %s19, 2
        // Predicated region
        $region69: #{tpu_custom_call.1} parent=67 // pred_check
          %p2610 = pneg %p278
        $region70: #{tpu_custom_call.1} parent=67 // pred_check_branch
          %2612 = sbr.rel (%p2610) target = $region72
        $region71: #{tpu_custom_call.1} parent=67 // pred_region
          %s2613 = sand.u32 %s263, 1
          %s2614 = scalar_lea.sflag [#allocation3], %s2613
          %s2615 = sand.u32 %s263, 1
          %s2616 = smul.addr %s2615, 256
          %s2617 = scalar_lea.vmem [#allocation2], %s2616
          %2618 = dma.done %s2614, 4096
        $region72: #{tpu_custom_call.1} parent=67 // pred_fallthru
          _
      $region68: #{tpu_custom_call.1} parent=5 // pred_fallthru
        _
    $region6: #{tpu_custom_call.1} parent=1 // loop_footer
      %s23 = sadd.s32 1, %s19
    $region7: #{tpu_custom_call.1} parent=1 // loop_footer_branch
      %18 = sbr.rel target = $region3
    $region8: #{tpu_custom_call.1} parent=1 // loop_exit
      _
    %2619 = vsyncpa [#allocation3], 1
    %s2620 = scalar_lea.sflag [#allocation3], 1
    %2621 = vsyncpa %s2620, 1

</llo_original>
